<compile_context>
chip_gen: v7x
topology: tpu7x:2x2x1
jax: 0.10.0
libtpu: 0.0.40
codegen_flags: <defaults>
</compile_context>

<pallas_src>
import functools

import jax
import jax.numpy as jnp
from jax.experimental import pallas as pl
from jax.experimental.pallas import tpu as pltpu

_LANE = 128


def _round_up(v, m):
    return ((v + m - 1) // m) * m


def _pick_tile(n, candidates):
    for c in candidates:
        if n % c == 0:
            return c
    return _LANE


def _vmem_limit_bytes():
    """Generation-aware VMEM limit: ~80% of physical, conservative fallback."""
    cap = None
    try:
        info = pltpu.get_tpu_info()
        cap = int(getattr(info, "vmem_capacity_bytes", 0)) or None
    except Exception:
        cap = None
    if cap is None:
        cap = 64 * 1024 * 1024  # conservative: v7x per-TC physical VMEM
    # v5e/v6e (128 MiB) -> ~102 MiB; v7x (64 MiB) -> 48 MiB.
    return max(32 * 1024 * 1024, min(int(cap * 0.8), cap - (16 << 20)))


# ---------------------------------------------------------------------------
# Kernels
# ---------------------------------------------------------------------------
def _gcn_fused_kernel(a_ref, x_ref, w1_ref, w2_ref, w3_ref, w4_ref,
                      pool_ref, consts_ref, out_ref):
    """Resident-A path: 4x (aggregate, project, bias, ReLU) + mean-pool + fc."""
    a = a_ref[...]                       # [N, N] bf16 normalized adjacency
    consts = consts_ref[...]             # [8, 128] f32 packed constants

    def layer(h_bf16, w_ref, row):
        # Aggregate-first: ordering is MXU-neutral here (every width fits one
        # lane tile); chosen to match the tiled path exactly.
        agg = jnp.dot(a, h_bf16, preferred_element_type=jnp.float32)
        z = jnp.dot(agg.astype(jnp.bfloat16), w_ref[...],
                    preferred_element_type=jnp.float32)
        return jnp.maximum(z + consts[row:row + 1, :z.shape[1]], 0.0)

    h = layer(x_ref[...], w1_ref, 0)                    # [N, 128]
    h = layer(h.astype(jnp.bfloat16), w2_ref, 1)        # [N, 128] (64 real)
    h = layer(h.astype(jnp.bfloat16), w3_ref, 2)        # [N, 128] (64 real)
    h = layer(h.astype(jnp.bfloat16), w4_ref, 3)        # [N, 128] (32 real)

    pooled = jnp.dot(pool_ref[...], h.astype(jnp.bfloat16),
                     preferred_element_type=jnp.float32)   # [G, 128]
    wfc = consts[4:5, :]                                   # [1, 128] (32 real)
    bfc = consts[5:6, 0:1]                                 # [1, 1]
    # fc as VPU multiply + row reduce (no 1-column MXU pass).
    out_ref[...] = jnp.sum(pooled * wfc, axis=-1, keepdims=True) + bfc


def _gcn_conv_tiled_kernel(a_ref, h_ref, w_ref, consts_ref, out_ref, acc_ref,
                           *, bias_row):
    """One GCN layer on a (row-panel, contraction) grid over A.

    a_ref      : [TM, TK]   bf16 panel of the normalized adjacency (streamed)
    h_ref      : [TK, Fin]  bf16 slice of the previous layer's activations
    w_ref      : [Fin,Fout] bf16 layer weight
    consts_ref : [8, 128]   f32 packed biases
    out_ref    : [TM, Fout] bf16 this layer's activations (row panel)
    acc_ref    : [TM, Fin]  f32 VMEM accumulator for the aggregation
    """
    k = pl.program_id(1)

    @pl.when(k == 0)
    def _():
        acc_ref[...] = jnp.zeros_like(acc_ref)

    acc_ref[...] += jnp.dot(a_ref[...], h_ref[...],
                            preferred_element_type=jnp.float32)

    @pl.when(k == pl.num_programs(1) - 1)
    def _():
        z = jnp.dot(acc_ref[...].astype(jnp.bfloat16), w_ref[...],
                    preferred_element_type=jnp.float32)
        b = consts_ref[bias_row:bias_row + 1, :z.shape[1]]
        out_ref[...] = jnp.maximum(z + b, 0.0).astype(out_ref.dtype)


def _pool_fc_kernel(pool_ref, h_ref, consts_ref, out_ref):
    """global_mean_pool (as dense matmul) + Linear(32, 1)."""
    pooled = jnp.dot(pool_ref[...], h_ref[...],
                     preferred_element_type=jnp.float32)       # [G, 128]
    wfc = consts_ref[4:5, :pooled.shape[1]]
    bfc = consts_ref[5:6, 0:1]
    out_ref[...] = jnp.sum(pooled * wfc, axis=-1, keepdims=True) + bfc


# ---------------------------------------------------------------------------
# Wrapper
# ---------------------------------------------------------------------------
def gcn_regression_forward(x, edge_index, batch, params, num_graphs,
                           *, force_tiled=False):
    n, input_dim = x.shape
    n_pad = max(_LANE, _round_up(n, _LANE))          # lane/sublane aligned N
    g_pad = max(16, _round_up(num_graphs, 16))       # bf16 sublane tile = 16
    f_in_pad = max(_LANE, _round_up(input_dim, _LANE))

    # --- normalized adjacency D^{-1/2}(A+I)D^{-1/2}, A[target, source].
    # Single fused pass producing bf16 directly: degrees from edge_index,
    # per-edge weight dinv[t]*dinv[s], one scatter-add.  Padded rows/cols stay
    # all-zero (no self loop), so padded nodes never contaminate real nodes.
    self_idx = jnp.arange(n, dtype=edge_index.dtype)
    src = jnp.concatenate([edge_index[0], self_idx])
    tgt = jnp.concatenate([edge_index[1], self_idx])
    deg = jnp.zeros((n_pad,), jnp.float32).at[tgt].add(1.0)
    dinv = jnp.where(deg > 0, jax.lax.rsqrt(deg), 0.0)
    vals = (dinv[tgt] * dinv[src]).astype(jnp.bfloat16)
    a_norm = jnp.zeros((n_pad, n_pad), jnp.bfloat16).at[tgt, src].add(vals)

    # --- node features: zero-padded rows and lanes (lane-dense bf16).
    x_pad = jnp.zeros((n_pad, f_in_pad), jnp.float32).at[:n, :input_dim].set(x)
    x_pad = x_pad.astype(jnp.bfloat16)

    # --- global_mean_pool as a dense [G_pad, N_pad] operator (0 on padding).
    batch_pad = jnp.full((n_pad,), -1, jnp.int32).at[:n].set(batch)
    onehot = (batch_pad[None, :] == jnp.arange(g_pad)[:, None]).astype(jnp.float32)
    counts = onehot.sum(axis=1, keepdims=True)
    pool = (onehot / jnp.maximum(counts, 1.0)).astype(jnp.bfloat16)

    # --- weights zero-padded to lane-dense (multiple of 128) widths.
    def pad_w(w, rows, cols):
        buf = jnp.zeros((rows, cols), jnp.float32)
        return buf.at[:w.shape[0], :w.shape[1]].set(w).astype(jnp.bfloat16)

    in_w = f_in_pad
    ws = []
    for i in range(1, 5):
        w = params[f"w{i}"]
        out_w = max(_LANE, _round_up(w.shape[1], _LANE))
        ws.append(pad_w(w, in_w, out_w))
        in_w = out_w

    # --- biases + fc packed into one [8, 128] f32 tile (widths from shapes).
    consts = jnp.zeros((8, _LANE), jnp.float32)
    for row, name in enumerate(("b1", "b2", "b3", "b4")):
        v = params[name].reshape(-1)
        consts = consts.at[row, :v.shape[0]].set(v)
    wfc = params["wfc"].reshape(-1)
    consts = consts.at[4, :wfc.shape[0]].set(wfc)
    consts = consts.at[5, 0].set(params["bfc"].reshape(()))

    vmem_limit = _vmem_limit_bytes()
    vmem_spec = pl.BlockSpec(memory_space=pltpu.MemorySpace.VMEM)

    # Rough resident-path footprint: A + X + pool + a few [N,128] f32 live
    # intermediates + weights + consts.
    a_bytes = n_pad * n_pad * 2
    work_bytes = (n_pad * (2 * f_in_pad + 4 * 4 * _LANE + 2 * g_pad)
                  + sum(int(w.size) * 2 for w in ws) + 8 * _LANE * 4)
    use_fused = (not force_tiled) and (a_bytes + work_bytes
                                       <= int(0.85 * vmem_limit))

    if use_fused:
        # Resident path: A DMA'd once, reused by all four layers.
        args = (a_norm, x_pad, *ws, pool, consts)
        out_pad = pl.pallas_call(
            _gcn_fused_kernel,
            out_shape=jax.ShapeDtypeStruct((g_pad, 1), jnp.float32),
            in_specs=[vmem_spec] * len(args),
            out_specs=vmem_spec,
            compiler_params=pltpu.CompilerParams(vmem_limit_bytes=vmem_limit),
        )(*args)
        return out_pad[:num_graphs]

    # Tiled path: per-layer (row-panel, contraction) grid over A.  A's DMA is
    # double-buffered under the MXU; the row axis is "parallel" so v7x's two
    # TensorCores split the node rows.
    tm = _pick_tile(n_pad, (512, 256, 128))
    tk = _pick_tile(n_pad, (4096, 2048, 1024, 512, 256, 128))
    grid = (n_pad // tm, n_pad // tk)

    h = x_pad
    for layer_idx, w in enumerate(ws):
        f_in = h.shape[1]
        f_out = w.shape[1]
        kernel = functools.partial(_gcn_conv_tiled_kernel, bias_row=layer_idx)
        h = pl.pallas_call(
            kernel,
            out_shape=jax.ShapeDtypeStruct((n_pad, f_out), jnp.bfloat16),
            grid_spec=pltpu.PrefetchScalarGridSpec(
                num_scalar_prefetch=0,
                grid=grid,
                in_specs=[
                    pl.BlockSpec((tm, tk), lambda i, k: (i, k)),       # A panel
                    pl.BlockSpec((tk, f_in), lambda i, k: (k, 0)),     # H slice
                    pl.BlockSpec((f_in, f_out), lambda i, k: (0, 0)),  # W
                    pl.BlockSpec((8, _LANE), lambda i, k: (0, 0)),     # consts
                ],
                out_specs=pl.BlockSpec((tm, f_out), lambda i, k: (i, 0)),
                scratch_shapes=[pltpu.VMEM((tm, f_in), jnp.float32)],
            ),
            compiler_params=pltpu.CompilerParams(
                dimension_semantics=("parallel", "arbitrary"),
                vmem_limit_bytes=vmem_limit),
        )(a_norm, h, w, consts)

    out_pad = pl.pallas_call(
        _pool_fc_kernel,
        out_shape=jax.ShapeDtypeStruct((g_pad, 1), jnp.float32),
        in_specs=[vmem_spec] * 3,
        out_specs=vmem_spec,
        compiler_params=pltpu.CompilerParams(vmem_limit_bytes=vmem_limit),
    )(pool, h, consts)
    return out_pad[:num_graphs]


def init_params(key, input_dim):
    """Deterministic synthetic parameters matching the module's shapes."""
    dims = [(input_dim, 128), (128, 64), (64, 64), (64, 32)]
    keys = jax.random.split(key, 6)
    params = {}
    for i, (fin, fout) in enumerate(dims, start=1):
        lim = (6.0 / (fin + fout)) ** 0.5  # glorot-uniform like GCNConv
        params[f"w{i}"] = jax.random.uniform(
            keys[i - 1], (fin, fout), jnp.float32, -lim, lim)
        params[f"b{i}"] = jnp.zeros((1, fout), jnp.float32)
    lim = 1.0 / (32.0 ** 0.5)              # nn.Linear default-ish init
    params["wfc"] = jax.random.uniform(keys[4], (32, 1), jnp.float32, -lim, lim)
    params["bfc"] = jax.random.uniform(keys[5], (1, 1), jnp.float32, -lim, lim)
    return params


if __name__ == "__main__":
    key = jax.random.PRNGKey(0)
    k_x, k_p = jax.random.split(key)

    num_graphs = 2
    nodes_per_graph = 6
    n = num_graphs * nodes_per_graph
    input_dim = 16

    # Node features [N, input_dim]
    x = jax.random.normal(k_x, (n, input_dim), jnp.float32)

    # Two undirected ring graphs of 6 nodes each (edges in both directions).
    src, dst = [], []
    for g in range(num_graphs):
        base = g * nodes_per_graph
        for i in range(nodes_per_graph):
            u, v = base + i, base + (i + 1) % nodes_per_graph
            src += [u, v]
            dst += [v, u]
    edge_index = jnp.array([src, dst], dtype=jnp.int32)   # [2, E]
    batch = jnp.array([g for g in range(num_graphs)
                       for _ in range(nodes_per_graph)], dtype=jnp.int32)

    params = init_params(k_p, input_dim)

    # Resident (fused) path and forced-tiled path; both must agree.
    out_resident = gcn_regression_forward(x, edge_index, batch, params,
                                          num_graphs)
    out_tiled = gcn_regression_forward(x, edge_index, batch, params,
                                       num_graphs, force_tiled=True)
    out_resident, out_tiled = jax.block_until_ready((out_resident, out_tiled))

    assert out_resident.shape == (num_graphs, 1), out_resident.shape
    assert out_tiled.shape == (num_graphs, 1), out_tiled.shape
    assert bool(jnp.all(jnp.isfinite(out_resident)))
    assert bool(jnp.allclose(out_resident, out_tiled, atol=1e-3, rtol=1e-3)), (
        out_resident, out_tiled)
    print("KERNEL_OK")
</pallas_src>

<mosaic_0001>
module attributes {stable_mosaic.version = 11 : i64} {
  func.func @_gcn_fused_kernel(%arg0: memref<128x128xbf16, #tpu.memory_space<vmem>>, %arg1: memref<128x128xbf16, #tpu.memory_space<vmem>>, %arg2: memref<128x128xbf16, #tpu.memory_space<vmem>>, %arg3: memref<128x128xbf16, #tpu.memory_space<vmem>>, %arg4: memref<128x128xbf16, #tpu.memory_space<vmem>>, %arg5: memref<128x128xbf16, #tpu.memory_space<vmem>>, %arg6: memref<16x128xbf16, #tpu.memory_space<vmem>>, %arg7: memref<8x128xf32, #tpu.memory_space<vmem>>, %arg8: memref<16x1xf32, #tpu.memory_space<vmem>>) attributes {dimension_semantics = [], scalar_prefetch = 0 : i64, scratch_operands = 0 : i64, tpu.core_type = #tpu.core_type<tc>} {
    %c0 = arith.constant 0 : index
    %c0_0 = arith.constant 0 : index
    %0 = vector.load %arg0[%c0, %c0_0] : memref<128x128xbf16, #tpu.memory_space<vmem>>, vector<128x128xbf16>
    %c0_1 = arith.constant 0 : index
    %c0_2 = arith.constant 0 : index
    %1 = vector.load %arg7[%c0_1, %c0_2] : memref<8x128xf32, #tpu.memory_space<vmem>>, vector<8x128xf32>
    %c0_3 = arith.constant 0 : index
    %c0_4 = arith.constant 0 : index
    %2 = vector.load %arg1[%c0_3, %c0_4] : memref<128x128xbf16, #tpu.memory_space<vmem>>, vector<128x128xbf16>
    %cst = arith.constant dense<0.000000e+00> : vector<128x128xf32>
    %3 = tpu.matmul %0, %2, %cst {dimension_numbers = #tpu.dot_dimension_numbers<[1], [0], [0], [1], [0, 0, 1, 1], [], []>} : vector<128x128xbf16>, vector<128x128xbf16>, vector<128x128xf32> -> vector<128x128xf32>
    %4 = arith.truncf %3 : vector<128x128xf32> to vector<128x128xbf16>
    %c0_5 = arith.constant 0 : index
    %c0_6 = arith.constant 0 : index
    %5 = vector.load %arg2[%c0_5, %c0_6] : memref<128x128xbf16, #tpu.memory_space<vmem>>, vector<128x128xbf16>
    %cst_7 = arith.constant dense<0.000000e+00> : vector<128x128xf32>
    %6 = tpu.matmul %4, %5, %cst_7 {dimension_numbers = #tpu.dot_dimension_numbers<[1], [0], [0], [1], [0, 0, 1, 1], [], []>} : vector<128x128xbf16>, vector<128x128xbf16>, vector<128x128xf32> -> vector<128x128xf32>
    %7 = vector.extract_strided_slice %1 {offsets = [0, 0], sizes = [1, 128], strides = [1, 1]} : vector<8x128xf32> to vector<1x128xf32>
    %8 = vector.broadcast %7 : vector<1x128xf32> to vector<128x128xf32>
    %9 = arith.addf %6, %8 : vector<128x128xf32>
    %cst_8 = arith.constant 0.000000e+00 : f32
    %10 = vector.broadcast %cst_8 : f32 to vector<128x128xf32>
    %11 = arith.maximumf %9, %10 : vector<128x128xf32>
    %12 = arith.truncf %11 : vector<128x128xf32> to vector<128x128xbf16>
    %cst_9 = arith.constant dense<0.000000e+00> : vector<128x128xf32>
    %13 = tpu.matmul %0, %12, %cst_9 {dimension_numbers = #tpu.dot_dimension_numbers<[1], [0], [0], [1], [0, 0, 1, 1], [], []>} : vector<128x128xbf16>, vector<128x128xbf16>, vector<128x128xf32> -> vector<128x128xf32>
    %14 = arith.truncf %13 : vector<128x128xf32> to vector<128x128xbf16>
    %c0_10 = arith.constant 0 : index
    %c0_11 = arith.constant 0 : index
    %15 = vector.load %arg3[%c0_10, %c0_11] : memref<128x128xbf16, #tpu.memory_space<vmem>>, vector<128x128xbf16>
    %cst_12 = arith.constant dense<0.000000e+00> : vector<128x128xf32>
    %16 = tpu.matmul %14, %15, %cst_12 {dimension_numbers = #tpu.dot_dimension_numbers<[1], [0], [0], [1], [0, 0, 1, 1], [], []>} : vector<128x128xbf16>, vector<128x128xbf16>, vector<128x128xf32> -> vector<128x128xf32>
    %17 = vector.extract_strided_slice %1 {offsets = [1, 0], sizes = [1, 128], strides = [1, 1]} : vector<8x128xf32> to vector<1x128xf32>
    %18 = vector.broadcast %17 : vector<1x128xf32> to vector<128x128xf32>
    %19 = arith.addf %16, %18 : vector<128x128xf32>
    %cst_13 = arith.constant 0.000000e+00 : f32
    %20 = vector.broadcast %cst_13 : f32 to vector<128x128xf32>
    %21 = arith.maximumf %19, %20 : vector<128x128xf32>
    %22 = arith.truncf %21 : vector<128x128xf32> to vector<128x128xbf16>
    %cst_14 = arith.constant dense<0.000000e+00> : vector<128x128xf32>
    %23 = tpu.matmul %0, %22, %cst_14 {dimension_numbers = #tpu.dot_dimension_numbers<[1], [0], [0], [1], [0, 0, 1, 1], [], []>} : vector<128x128xbf16>, vector<128x128xbf16>, vector<128x128xf32> -> vector<128x128xf32>
    %24 = arith.truncf %23 : vector<128x128xf32> to vector<128x128xbf16>
    %c0_15 = arith.constant 0 : index
    %c0_16 = arith.constant 0 : index
    %25 = vector.load %arg4[%c0_15, %c0_16] : memref<128x128xbf16, #tpu.memory_space<vmem>>, vector<128x128xbf16>
    %cst_17 = arith.constant dense<0.000000e+00> : vector<128x128xf32>
    %26 = tpu.matmul %24, %25, %cst_17 {dimension_numbers = #tpu.dot_dimension_numbers<[1], [0], [0], [1], [0, 0, 1, 1], [], []>} : vector<128x128xbf16>, vector<128x128xbf16>, vector<128x128xf32> -> vector<128x128xf32>
    %27 = vector.extract_strided_slice %1 {offsets = [2, 0], sizes = [1, 128], strides = [1, 1]} : vector<8x128xf32> to vector<1x128xf32>
    %28 = vector.broadcast %27 : vector<1x128xf32> to vector<128x128xf32>
    %29 = arith.addf %26, %28 : vector<128x128xf32>
    %cst_18 = arith.constant 0.000000e+00 : f32
    %30 = vector.broadcast %cst_18 : f32 to vector<128x128xf32>
    %31 = arith.maximumf %29, %30 : vector<128x128xf32>
    %32 = arith.truncf %31 : vector<128x128xf32> to vector<128x128xbf16>
    %cst_19 = arith.constant dense<0.000000e+00> : vector<128x128xf32>
    %33 = tpu.matmul %0, %32, %cst_19 {dimension_numbers = #tpu.dot_dimension_numbers<[1], [0], [0], [1], [0, 0, 1, 1], [], []>} : vector<128x128xbf16>, vector<128x128xbf16>, vector<128x128xf32> -> vector<128x128xf32>
    %34 = arith.truncf %33 : vector<128x128xf32> to vector<128x128xbf16>
    %c0_20 = arith.constant 0 : index
    %c0_21 = arith.constant 0 : index
    %35 = vector.load %arg5[%c0_20, %c0_21] : memref<128x128xbf16, #tpu.memory_space<vmem>>, vector<128x128xbf16>
    %cst_22 = arith.constant dense<0.000000e+00> : vector<128x128xf32>
    %36 = tpu.matmul %34, %35, %cst_22 {dimension_numbers = #tpu.dot_dimension_numbers<[1], [0], [0], [1], [0, 0, 1, 1], [], []>} : vector<128x128xbf16>, vector<128x128xbf16>, vector<128x128xf32> -> vector<128x128xf32>
    %37 = vector.extract_strided_slice %1 {offsets = [3, 0], sizes = [1, 128], strides = [1, 1]} : vector<8x128xf32> to vector<1x128xf32>
    %38 = vector.broadcast %37 : vector<1x128xf32> to vector<128x128xf32>
    %39 = arith.addf %36, %38 : vector<128x128xf32>
    %cst_23 = arith.constant 0.000000e+00 : f32
    %40 = vector.broadcast %cst_23 : f32 to vector<128x128xf32>
    %41 = arith.maximumf %39, %40 : vector<128x128xf32>
    %c0_24 = arith.constant 0 : index
    %c0_25 = arith.constant 0 : index
    %42 = vector.load %arg6[%c0_24, %c0_25] : memref<16x128xbf16, #tpu.memory_space<vmem>>, vector<16x128xbf16>
    %43 = arith.truncf %41 : vector<128x128xf32> to vector<128x128xbf16>
    %cst_26 = arith.constant dense<0.000000e+00> : vector<16x128xf32>
    %44 = tpu.matmul %42, %43, %cst_26 {dimension_numbers = #tpu.dot_dimension_numbers<[1], [0], [0], [1], [0, 0, 1, 1], [], []>} : vector<16x128xbf16>, vector<128x128xbf16>, vector<16x128xf32> -> vector<16x128xf32>
    %45 = vector.extract_strided_slice %1 {offsets = [4, 0], sizes = [1, 128], strides = [1, 1]} : vector<8x128xf32> to vector<1x128xf32>
    %46 = vector.extract_strided_slice %1 {offsets = [5, 0], sizes = [1, 1], strides = [1, 1]} : vector<8x128xf32> to vector<1x1xf32>
    %47 = vector.broadcast %45 : vector<1x128xf32> to vector<16x128xf32>
    %48 = arith.mulf %44, %47 : vector<16x128xf32>
    %cst_27 = arith.constant dense<0.000000e+00> : vector<16xf32>
    %49 = vector.multi_reduction <add>, %48, %cst_27 [1] : vector<16x128xf32> to vector<16xf32>
    %50 = vector.shape_cast %49 : vector<16xf32> to vector<16x1xf32>
    %51 = vector.broadcast %46 : vector<1x1xf32> to vector<16x1xf32>
    %52 = arith.addf %50, %51 : vector<16x1xf32>
    %c0_28 = arith.constant 0 : index
    %c0_29 = arith.constant 0 : index
    %53 = vector.load %arg8[%c0_28, %c0_29] : memref<16x1xf32, #tpu.memory_space<vmem>>, vector<16x1xf32>
    tpu.vector_store %arg8[%c0_28, %c0_29], %52 {strides = array<i32>} : memref<16x1xf32, #tpu.memory_space<vmem>>, vector<16x1xf32>,
    return
  }
}

</mosaic_0001>

<llo_original>
// kernel: tpu_custom_call.1
$region0: #{tpu_custom_call.1}
  #allocation0 [shape = 'u32[]', space=smem, size = 0x4, offset = 0x4, fixed_abs, tag = 'smem constant byte address 0x4 - core index']
  #allocation1 [shape = 'u32[144,128]{1,0:T(1,128)}', space=vmem, size = 0x12000, scoped, tag = 'internal scratch']
  %s0 = inlined_call_operand.hbm [shape: bf16[128,128], index: 0, kind: input, shape index: {}]
  %s1 = inlined_call_operand.hbm [shape: bf16[128,128], index: 1, kind: input, shape index: {}]
  %s2 = inlined_call_operand.hbm [shape: bf16[128,128], index: 2, kind: input, shape index: {}]
  %s3 = inlined_call_operand.hbm [shape: bf16[128,128], index: 3, kind: input, shape index: {}]
  %s4 = inlined_call_operand.hbm [shape: bf16[128,128], index: 4, kind: input, shape index: {}]
  %s5 = inlined_call_operand.hbm [shape: bf16[128,128], index: 5, kind: input, shape index: {}]
  %s6 = inlined_call_operand.vmem [shape: bf16[16,128], index: 6, kind: input, shape index: {}]
  %s7 = inlined_call_operand.vmem [shape: f32[8,128], index: 7, kind: input, shape index: {}]
  %s8 = inlined_call_operand.vmem [shape: f32[16,1], index: 8, kind: output, shape index: {}]
  %s9 = sld [smem:[#allocation0]]
  $region66: #{tpu_custom_call.1} parent=0
    _
  %s11 = ssub.s32 1, %s9
  %s12 = scalar_select 0, %s11, %s9
  $region1: #{tpu_custom_call.1} parent=0
    #allocation2 [shape = 'u8[32768]{0}', space=vmem, size = 0x8000, scoped, tag = 'input window, operand 0, single buffered']
    #allocation3 [shape = 's32[1]{0}', space=sflag, size = 0x4, scoped, tag = 'scoped memory for tpu_custom_call.1']
    #allocation4 [shape = 'u8[32768]{0}', space=vmem, size = 0x8000, scoped, tag = 'input window, operand 1, single buffered']
    #allocation5 [shape = 's32[1]{0}', space=sflag, size = 0x4, scoped, tag = 'scoped memory for tpu_custom_call.1']
    #allocation6 [shape = 'u8[32768]{0}', space=vmem, size = 0x8000, scoped, tag = 'input window, operand 2, single buffered']
    #allocation7 [shape = 'u8[32768]{0}', space=vmem, size = 0x8000, scoped, tag = 'input window, operand 3, single buffered']
    #allocation8 [shape = 's32[1]{0}', space=sflag, size = 0x4, scoped, tag = 'scoped memory for tpu_custom_call.1']
    #allocation9 [shape = 'u8[32768]{0}', space=vmem, size = 0x8000, scoped, tag = 'input window, operand 4, single buffered']
    #allocation10 [shape = 'u8[32768]{0}', space=vmem, size = 0x8000, scoped, tag = 'input window, operand 5, single buffered']
    #allocation11 [shape = 's32[1]{0}', space=sflag, size = 0x4, scoped, tag = 'scoped memory for tpu_custom_call.1']
    %13 = vsyncpa [#allocation3], 0
    %14 = vsyncpa [#allocation5], 0
    %15 = vsyncpa [#allocation8], 0
    %16 = vsyncpa [#allocation11], 0
    // Predicated region
    $region2: #{tpu_custom_call.1} parent=1 // pred_check
      _
    $region3: #{tpu_custom_call.1} parent=1 // pred_check_branch
      %18 = sbr.rel (0) target = $region5
    $region4: #{tpu_custom_call.1} parent=1 // pred_region
      %s20 = ssub.s32 1024, 1024
      %21 = vsyncadd [#allocation3], %s20
      %s22 = sshll.u32 [#allocation2], 4
      %s23 = int_to_ptr.vmem [resolvable:$true] %s22
      %28 = dma.hbm_to_vmem [thread:$0]  %s0, 1024, %s23, [#allocation3], 64, 64, 4
    $region5: #{tpu_custom_call.1} parent=1 // pred_fallthru
      _
    // Predicated region
    $region6: #{tpu_custom_call.1} parent=1 // pred_check
      _
    $region7: #{tpu_custom_call.1} parent=1 // pred_check_branch
      %30 = sbr.rel (0) target = $region9
    $region8: #{tpu_custom_call.1} parent=1 // pred_region
      %s32 = ssub.s32 1024, 1024
      %33 = vsyncadd [#allocation5], %s32
      %s34 = sshll.u32 [#allocation4], 4
      %s35 = int_to_ptr.vmem [resolvable:$true] %s34
      %40 = dma.hbm_to_vmem [thread:$0]  %s1, 1024, %s35, [#allocation5], 64, 64, 4
    $region9: #{tpu_custom_call.1} parent=1 // pred_fallthru
      _
    // Predicated region
    $region10: #{tpu_custom_call.1} parent=1 // pred_check
      _
    $region11: #{tpu_custom_call.1} parent=1 // pred_check_branch
      %42 = sbr.rel (0) target = $region13
    $region12: #{tpu_custom_call.1} parent=1 // pred_region
      %s44 = ssub.s32 1024, 1024
      %45 = vsyncadd [#allocation5], %s44
      %s46 = sshll.u32 [#allocation6], 4
      %s47 = int_to_ptr.vmem [resolvable:$true] %s46
      %52 = dma.hbm_to_vmem [thread:$0]  %s2, 1024, %s47, [#allocation5], 64, 64, 4
    $region13: #{tpu_custom_call.1} parent=1 // pred_fallthru
      _
    // Predicated region
    $region14: #{tpu_custom_call.1} parent=1 // pred_check
      _
    $region15: #{tpu_custom_call.1} parent=1 // pred_check_branch
      %54 = sbr.rel (0) target = $region17
    $region16: #{tpu_custom_call.1} parent=1 // pred_region
      %s56 = ssub.s32 1024, 1024
      %57 = vsyncadd [#allocation8], %s56
      %s58 = sshll.u32 [#allocation7], 4
      %s59 = int_to_ptr.vmem [resolvable:$true] %s58
      %64 = dma.hbm_to_vmem [thread:$0]  %s3, 1024, %s59, [#allocation8], 64, 64, 4
    $region17: #{tpu_custom_call.1} parent=1 // pred_fallthru
      _
    // Predicated region
    $region18: #{tpu_custom_call.1} parent=1 // pred_check
      _
    $region19: #{tpu_custom_call.1} parent=1 // pred_check_branch
      %66 = sbr.rel (0) target = $region21
    $region20: #{tpu_custom_call.1} parent=1 // pred_region
      %s68 = ssub.s32 1024, 1024
      %69 = vsyncadd [#allocation8], %s68
      %s70 = sshll.u32 [#allocation9], 4
      %s71 = int_to_ptr.vmem [resolvable:$true] %s70
      %76 = dma.hbm_to_vmem [thread:$0]  %s4, 1024, %s71, [#allocation8], 64, 64, 4
    $region21: #{tpu_custom_call.1} parent=1 // pred_fallthru
      _
    // Predicated region
    $region22: #{tpu_custom_call.1} parent=1 // pred_check
      _
    $region23: #{tpu_custom_call.1} parent=1 // pred_check_branch
      %78 = sbr.rel (0) target = $region25
    $region24: #{tpu_custom_call.1} parent=1 // pred_region
      %s80 = ssub.s32 1024, 1024
      %81 = vsyncadd [#allocation11], %s80
      %s82 = sshll.u32 [#allocation10], 4
      %s83 = int_to_ptr.vmem [resolvable:$true] %s82
      %88 = dma.hbm_to_vmem [thread:$0]  %s5, 1024, %s83, [#allocation11], 64, 64, 4
    $region25: #{tpu_custom_call.1} parent=1 // pred_fallthru
      _
    // Predicated region
    $region26: #{tpu_custom_call.1} parent=1 // pred_check
      _
    $region27: #{tpu_custom_call.1} parent=1 // pred_check_branch
      %90 = sbr.rel (0) target = $region29
    $region28: #{tpu_custom_call.1} parent=1 // pred_region
      _
    $region29: #{tpu_custom_call.1} parent=1 // pred_fallthru
      _
    // Predicated region
    $region30: #{tpu_custom_call.1} parent=1 // pred_check
      _
    $region31: #{tpu_custom_call.1} parent=1 // pred_check_branch
      %92 = sbr.rel (0) target = $region33
    $region32: #{tpu_custom_call.1} parent=1 // pred_region
      _
    $region33: #{tpu_custom_call.1} parent=1 // pred_fallthru
      _
    // Predicated region
    $region34: #{tpu_custom_call.1} parent=1 // pred_check
      _
    $region35: #{tpu_custom_call.1} parent=1 // pred_check_branch
      %94 = sbr.rel (0) target = $region37
    $region36: #{tpu_custom_call.1} parent=1 // pred_region
      %95 = dma.done [#allocation3], 1024
    $region37: #{tpu_custom_call.1} parent=1 // pred_fallthru
      _
    // Predicated region
    $region38: #{tpu_custom_call.1} parent=1 // pred_check
      _
    $region39: #{tpu_custom_call.1} parent=1 // pred_check_branch
      %97 = sbr.rel (0) target = $region41
    $region40: #{tpu_custom_call.1} parent=1 // pred_region
      %98 = dma.done [#allocation5], 1024
    $region41: #{tpu_custom_call.1} parent=1 // pred_fallthru
      _
    // Predicated region
    $region42: #{tpu_custom_call.1} parent=1 // pred_check
      _
    $region43: #{tpu_custom_call.1} parent=1 // pred_check_branch
      %100 = sbr.rel (0) target = $region45
    $region44: #{tpu_custom_call.1} parent=1 // pred_region
      %101 = dma.done [#allocation5], 1024
    $region45: #{tpu_custom_call.1} parent=1 // pred_fallthru
      _
    // Predicated region
    $region46: #{tpu_custom_call.1} parent=1 // pred_check
      _
    $region47: #{tpu_custom_call.1} parent=1 // pred_check_branch
      %103 = sbr.rel (0) target = $region49
    $region48: #{tpu_custom_call.1} parent=1 // pred_region
      %104 = dma.done [#allocation8], 1024
    $region49: #{tpu_custom_call.1} parent=1 // pred_fallthru
      _
    // Predicated region
    $region50: #{tpu_custom_call.1} parent=1 // pred_check
      _
    $region51: #{tpu_custom_call.1} parent=1 // pred_check_branch
      %106 = sbr.rel (0) target = $region53
    $region52: #{tpu_custom_call.1} parent=1 // pred_region
      %107 = dma.done [#allocation8], 1024
    $region53: #{tpu_custom_call.1} parent=1 // pred_fallthru
      _
    // Predicated region
    $region54: #{tpu_custom_call.1} parent=1 // pred_check
      _
    $region55: #{tpu_custom_call.1} parent=1 // pred_check_branch
      %109 = sbr.rel (0) target = $region57
    $region56: #{tpu_custom_call.1} parent=1 // pred_region
      %110 = dma.done [#allocation11], 1024
    $region57: #{tpu_custom_call.1} parent=1 // pred_fallthru
      _
    %v112 = vld [vmem:[#allocation2] sm:$0xf]
    %v113 = vld [vmem:[#allocation2 + $0x4] sm:$0xf]
    %v114 = vld [vmem:[#allocation2 + $0x8] sm:$0xf]
    %v115 = vld [vmem:[#allocation2 + $0xc] sm:$0xf]
    %v116 = vld [vmem:[#allocation2 + $0x10] sm:$0xf]
    %v117 = vld [vmem:[#allocation2 + $0x14] sm:$0xf]
    %v118 = vld [vmem:[#allocation2 + $0x18] sm:$0xf]
    %v119 = vld [vmem:[#allocation2 + $0x1c] sm:$0xf]
    %v120 = vld [vmem:[#allocation2 + $0x20] sm:$0xf]
    %v121 = vld [vmem:[#allocation2 + $0x24] sm:$0xf]
    %v122 = vld [vmem:[#allocation2 + $0x28] sm:$0xf]
    %v123 = vld [vmem:[#allocation2 + $0x2c] sm:$0xf]
    %v124 = vld [vmem:[#allocation2 + $0x30] sm:$0xf]
    %v125 = vld [vmem:[#allocation2 + $0x34] sm:$0xf]
    %v126 = vld [vmem:[#allocation2 + $0x38] sm:$0xf]
    %v127 = vld [vmem:[#allocation2 + $0x3c] sm:$0xf]
    %v128 = vld [vmem:[%s7] sm:$0xff]
    %v129 = vld [vmem:[#allocation4] sm:$0xf]
    %v130 = vld [vmem:[#allocation4 + $0x4] sm:$0xf]
    %v131 = vld [vmem:[#allocation4 + $0x8] sm:$0xf]
    %v132 = vld [vmem:[#allocation4 + $0xc] sm:$0xf]
    %v133 = vld [vmem:[#allocation4 + $0x10] sm:$0xf]
    %v134 = vld [vmem:[#allocation4 + $0x14] sm:$0xf]
    %v135 = vld [vmem:[#allocation4 + $0x18] sm:$0xf]
    %v136 = vld [vmem:[#allocation4 + $0x1c] sm:$0xf]
    %v137 = vld [vmem:[#allocation4 + $0x20] sm:$0xf]
    %v138 = vld [vmem:[#allocation4 + $0x24] sm:$0xf]
    %v139 = vld [vmem:[#allocation4 + $0x28] sm:$0xf]
    %v140 = vld [vmem:[#allocation4 + $0x2c] sm:$0xf]
    %v141 = vld [vmem:[#allocation4 + $0x30] sm:$0xf]
    %v142 = vld [vmem:[#allocation4 + $0x34] sm:$0xf]
    %v143 = vld [vmem:[#allocation4 + $0x38] sm:$0xf]
    %v144 = vld [vmem:[#allocation4 + $0x3c] sm:$0xf]
    %v161 = vunpack.c.l.b16 %v112
    %v162 = vunpack.c.l.b16 %v113
    %v163 = vunpack.c.l.b16 %v114
    %v164 = vunpack.c.l.b16 %v115
    %v165 = vunpack.c.l.b16 %v116
    %v166 = vunpack.c.l.b16 %v117
    %v167 = vunpack.c.l.b16 %v118
    %v168 = vunpack.c.l.b16 %v119
    %v169 = vunpack.c.l.b16 %v120
    %v170 = vunpack.c.l.b16 %v121
    %v171 = vunpack.c.l.b16 %v122
    %v172 = vunpack.c.l.b16 %v123
    %v173 = vunpack.c.l.b16 %v124
    %v174 = vunpack.c.l.b16 %v125
    %v175 = vunpack.c.l.b16 %v126
    %v176 = vunpack.c.l.b16 %v127
    %v177 = vpack.c.b16 %v162, %v161
    %v178 = vpack.c.b16 %v164, %v163
    %v179 = vpack.c.b16 %v166, %v165
    %v180 = vpack.c.b16 %v168, %v167
    %v181 = vpack.c.b16 %v170, %v169
    %v182 = vpack.c.b16 %v172, %v171
    %v183 = vpack.c.b16 %v174, %v173
    %v184 = vpack.c.b16 %v176, %v175
    %v209 = vunpack.c.l.b16 %v129
    %v210 = vunpack.c.l.b16 %v130
    %v211 = vunpack.c.l.b16 %v131
    %v212 = vunpack.c.l.b16 %v132
    %v213 = vunpack.c.l.b16 %v133
    %v214 = vunpack.c.l.b16 %v134
    %v215 = vunpack.c.l.b16 %v135
    %v216 = vunpack.c.l.b16 %v136
    %v217 = vunpack.c.l.b16 %v137
    %v218 = vunpack.c.l.b16 %v138
    %v219 = vunpack.c.l.b16 %v139
    %v220 = vunpack.c.l.b16 %v140
    %v221 = vunpack.c.l.b16 %v141
    %v222 = vunpack.c.l.b16 %v142
    %v223 = vunpack.c.l.b16 %v143
    %v224 = vunpack.c.l.b16 %v144
    %v225 = vpack.c.b16 %v210, %v209
    %v226 = vpack.c.b16 %v212, %v211
    %v227 = vpack.c.b16 %v214, %v213
    %v228 = vpack.c.b16 %v216, %v215
    %v229 = vpack.c.b16 %v218, %v217
    %v230 = vpack.c.b16 %v220, %v219
    %v231 = vpack.c.b16 %v222, %v221
    %v232 = vpack.c.b16 %v224, %v223
    %241 = vmatprep.subr.bf16.mxu0 0
    %242 = vmatpush1.bf16.msra.mxu0 %v225
    %243 = vmatprep.subr.bf16.mxu0 0
    %244 = vmatpush1.bf16.msra.mxu0 %v226
    %245 = vmatprep.subr.bf16.mxu0 0
    %246 = vmatpush1.bf16.msra.mxu0 %v227
    %247 = vmatprep.subr.bf16.mxu0 0
    %248 = vmatpush1.bf16.msra.mxu0 %v228
    %249 = vmatprep.subr.bf16.mxu0 0
    %250 = vmatpush1.bf16.msra.mxu0 %v229
    %251 = vmatprep.subr.bf16.mxu0 0
    %252 = vmatpush1.bf16.msra.mxu0 %v230
    %253 = vmatprep.subr.bf16.mxu0 0
    %254 = vmatpush1.bf16.msra.mxu0 %v231
    %255 = vmatprep.subr.bf16.mxu0 0
    %256 = vmatpush1.bf16.msra.mxu0 %v232
    %257 = vmatprep.subr.bf16.mxu0 0
    %258 = vmatpush1.bf16.msra.mxu0 0
    %259 = vmatprep.subr.bf16.mxu0 0
    %260 = vmatpush1.bf16.msra.mxu0 0
    %261 = vmatprep.subr.bf16.mxu0 0
    %262 = vmatpush1.bf16.msra.mxu0 0
    %263 = vmatprep.subr.bf16.mxu0 0
    %264 = vmatpush1.bf16.msra.mxu0 0
    %265 = vmatprep.subr.bf16.mxu0 0
    %266 = vmatpush1.bf16.msra.mxu0 0
    %267 = vmatprep.subr.bf16.mxu0 0
    %268 = vmatpush1.bf16.msra.mxu0 0
    %269 = vmatprep.subr.bf16.mxu0 0
    %270 = vmatpush1.bf16.msra.mxu0 0
    %271 = vmatprep.subr.bf16.mxu0 0
    %272 = vmatpush1.bf16.msra.mxu0 0
    %273 = vmatprep.mubr.bf16.mxu0 0
    %274 = vmatmul.mubr.bf16.gmra.mrb[0].mxu0 %v177
    %v275 = vpop.f32.mrb[0].mxu0
    %v276 = vadd.f32 0.0, %v275
    %v277 = vpop.f32.mrb[0].mxu0
    %v278 = vpop.f32.mrb[0].mxu0
    %v279 = vadd.f32 0.0, %v278
    %v280 = vpop.f32.mrb[0].mxu0
    %281 = vmatprep.mubr.bf16.mxu0 0
    %282 = vmatmul.mubr.bf16.gmra.mrb[0].mxu0 %v178
    %v283 = vpop.f32.mrb[0].mxu0
    %v284 = vadd.f32 0.0, %v283
    %v285 = vpop.f32.mrb[0].mxu0
    %v286 = vpop.f32.mrb[0].mxu0
    %v287 = vadd.f32 0.0, %v286
    %v288 = vpop.f32.mrb[0].mxu0
    %289 = vmatprep.mubr.bf16.mxu0 0
    %290 = vmatmul.mubr.bf16.gmra.mrb[0].mxu0 %v179
    %v291 = vpop.f32.mrb[0].mxu0
    %v292 = vadd.f32 0.0, %v291
    %v293 = vpop.f32.mrb[0].mxu0
    %v294 = vpop.f32.mrb[0].mxu0
    %v295 = vadd.f32 0.0, %v294
    %v296 = vpop.f32.mrb[0].mxu0
    %297 = vmatprep.mubr.bf16.mxu0 0
    %298 = vmatmul.mubr.bf16.gmra.mrb[0].mxu0 %v180
    %v299 = vpop.f32.mrb[0].mxu0
    %v300 = vadd.f32 0.0, %v299
    %v301 = vpop.f32.mrb[0].mxu0
    %v302 = vpop.f32.mrb[0].mxu0
    %v303 = vadd.f32 0.0, %v302
    %v304 = vpop.f32.mrb[0].mxu0
    %305 = vmatprep.mubr.bf16.mxu0 0
    %306 = vmatmul.mubr.bf16.gmra.mrb[0].mxu0 %v181
    %v307 = vpop.f32.mrb[0].mxu0
    %v308 = vadd.f32 0.0, %v307
    %v309 = vpop.f32.mrb[0].mxu0
    %v310 = vpop.f32.mrb[0].mxu0
    %v311 = vadd.f32 0.0, %v310
    %v312 = vpop.f32.mrb[0].mxu0
    %313 = vmatprep.mubr.bf16.mxu0 0
    %314 = vmatmul.mubr.bf16.gmra.mrb[0].mxu0 %v182
    %v315 = vpop.f32.mrb[0].mxu0
    %v316 = vadd.f32 0.0, %v315
    %v317 = vpop.f32.mrb[0].mxu0
    %v318 = vpop.f32.mrb[0].mxu0
    %v319 = vadd.f32 0.0, %v318
    %v320 = vpop.f32.mrb[0].mxu0
    %321 = vmatprep.mubr.bf16.mxu0 0
    %322 = vmatmul.mubr.bf16.gmra.mrb[0].mxu0 %v183
    %v323 = vpop.f32.mrb[0].mxu0
    %v324 = vadd.f32 0.0, %v323
    %v325 = vpop.f32.mrb[0].mxu0
    %v326 = vpop.f32.mrb[0].mxu0
    %v327 = vadd.f32 0.0, %v326
    %v328 = vpop.f32.mrb[0].mxu0
    %329 = vmatprep.mubr.bf16.mxu0 0
    %330 = vmatmul.mubr.bf16.gmra.mrb[0].mxu0 %v184
    %v331 = vpop.f32.mrb[0].mxu0
    %v332 = vadd.f32 0.0, %v331
    %v333 = vpop.f32.mrb[0].mxu0
    %v334 = vpop.f32.mrb[0].mxu0
    %v335 = vadd.f32 0.0, %v334
    %v336 = vpop.f32.mrb[0].mxu0
    %337 = vdwg.mxu0
    %v338 = vpack.c.bf16 %v279, %v276
    %v339 = vpack.c.bf16 %v287, %v284
    %v340 = vpack.c.bf16 %v295, %v292
    %v341 = vpack.c.bf16 %v303, %v300
    %v342 = vpack.c.bf16 %v311, %v308
    %v343 = vpack.c.bf16 %v319, %v316
    %v344 = vpack.c.bf16 %v327, %v324
    %v345 = vpack.c.bf16 %v335, %v332
    %v346 = vld [vmem:[#allocation6] sm:$0xf]
    %v347 = vld [vmem:[#allocation6 + $0x4] sm:$0xf]
    %v348 = vld [vmem:[#allocation6 + $0x8] sm:$0xf]
    %v349 = vld [vmem:[#allocation6 + $0xc] sm:$0xf]
    %v350 = vld [vmem:[#allocation6 + $0x10] sm:$0xf]
    %v351 = vld [vmem:[#allocation6 + $0x14] sm:$0xf]
    %v352 = vld [vmem:[#allocation6 + $0x18] sm:$0xf]
    %v353 = vld [vmem:[#allocation6 + $0x1c] sm:$0xf]
    %v354 = vld [vmem:[#allocation6 + $0x20] sm:$0xf]
    %v355 = vld [vmem:[#allocation6 + $0x24] sm:$0xf]
    %v356 = vld [vmem:[#allocation6 + $0x28] sm:$0xf]
    %v357 = vld [vmem:[#allocation6 + $0x2c] sm:$0xf]
    %v358 = vld [vmem:[#allocation6 + $0x30] sm:$0xf]
    %v359 = vld [vmem:[#allocation6 + $0x34] sm:$0xf]
    %v360 = vld [vmem:[#allocation6 + $0x38] sm:$0xf]
    %v361 = vld [vmem:[#allocation6 + $0x3c] sm:$0xf]
    %v362 = vlaneseq
    %v363 = vshrl.u32 %v362, 7
    %v364 = vsub.s32 0, %v363
    %v365 = vrot.slane %v128, %v364
    %v382 = vunpack.c.l.b16 %v346
    %v383 = vunpack.c.l.b16 %v347
    %v384 = vunpack.c.l.b16 %v348
    %v385 = vunpack.c.l.b16 %v349
    %v386 = vunpack.c.l.b16 %v350
    %v387 = vunpack.c.l.b16 %v351
    %v388 = vunpack.c.l.b16 %v352
    %v389 = vunpack.c.l.b16 %v353
    %v390 = vunpack.c.l.b16 %v354
    %v391 = vunpack.c.l.b16 %v355
    %v392 = vunpack.c.l.b16 %v356
    %v393 = vunpack.c.l.b16 %v357
    %v394 = vunpack.c.l.b16 %v358
    %v395 = vunpack.c.l.b16 %v359
    %v396 = vunpack.c.l.b16 %v360
    %v397 = vunpack.c.l.b16 %v361
    %v398 = vpack.c.b16 %v383, %v382
    %v399 = vpack.c.b16 %v385, %v384
    %v400 = vpack.c.b16 %v387, %v386
    %v401 = vpack.c.b16 %v389, %v388
    %v402 = vpack.c.b16 %v391, %v390
    %v403 = vpack.c.b16 %v393, %v392
    %v404 = vpack.c.b16 %v395, %v394
    %v405 = vpack.c.b16 %v397, %v396
    %414 = vmatprep.subr.bf16.mxu0 0
    %415 = vmatpush1.bf16.msra.mxu0 %v398
    %416 = vmatprep.subr.bf16.mxu0 0
    %417 = vmatpush1.bf16.msra.mxu0 %v399
    %418 = vmatprep.subr.bf16.mxu0 0
    %419 = vmatpush1.bf16.msra.mxu0 %v400
    %420 = vmatprep.subr.bf16.mxu0 0
    %421 = vmatpush1.bf16.msra.mxu0 %v401
    %422 = vmatprep.subr.bf16.mxu0 0
    %423 = vmatpush1.bf16.msra.mxu0 %v402
    %424 = vmatprep.subr.bf16.mxu0 0
    %425 = vmatpush1.bf16.msra.mxu0 %v403
    %426 = vmatprep.subr.bf16.mxu0 0
    %427 = vmatpush1.bf16.msra.mxu0 %v404
    %428 = vmatprep.subr.bf16.mxu0 0
    %429 = vmatpush1.bf16.msra.mxu0 %v405
    %430 = vmatprep.subr.bf16.mxu0 0
    %431 = vmatpush1.bf16.msra.mxu0 0
    %432 = vmatprep.subr.bf16.mxu0 0
    %433 = vmatpush1.bf16.msra.mxu0 0
    %434 = vmatprep.subr.bf16.mxu0 0
    %435 = vmatpush1.bf16.msra.mxu0 0
    %436 = vmatprep.subr.bf16.mxu0 0
    %437 = vmatpush1.bf16.msra.mxu0 0
    %438 = vmatprep.subr.bf16.mxu0 0
    %439 = vmatpush1.bf16.msra.mxu0 0
    %440 = vmatprep.subr.bf16.mxu0 0
    %441 = vmatpush1.bf16.msra.mxu0 0
    %442 = vmatprep.subr.bf16.mxu0 0
    %443 = vmatpush1.bf16.msra.mxu0 0
    %444 = vmatprep.subr.bf16.mxu0 0
    %445 = vmatpush1.bf16.msra.mxu0 0
    %446 = vmatprep.mubr.bf16.mxu0 0
    %447 = vmatmul.mubr.bf16.gmra.mrb[0].mxu0 %v338
    %v448 = vpop.f32.mrb[0].mxu0
    %v449 = vadd.f32 %v365, %v448
    %v450 = vpop.f32.mrb[0].mxu0
    %v451 = vpop.f32.mrb[0].mxu0
    %v452 = vadd.f32 %v365, %v451
    %v453 = vpop.f32.mrb[0].mxu0
    %454 = vmatprep.mubr.bf16.mxu0 0
    %455 = vmatmul.mubr.bf16.gmra.mrb[0].mxu0 %v339
    %v456 = vpop.f32.mrb[0].mxu0
    %v457 = vadd.f32 %v365, %v456
    %v458 = vpop.f32.mrb[0].mxu0
    %v459 = vpop.f32.mrb[0].mxu0
    %v460 = vadd.f32 %v365, %v459
    %v461 = vpop.f32.mrb[0].mxu0
    %462 = vmatprep.mubr.bf16.mxu0 0
    %463 = vmatmul.mubr.bf16.gmra.mrb[0].mxu0 %v340
    %v464 = vpop.f32.mrb[0].mxu0
    %v465 = vadd.f32 %v365, %v464
    %v466 = vpop.f32.mrb[0].mxu0
    %v467 = vpop.f32.mrb[0].mxu0
    %v468 = vadd.f32 %v365, %v467
    %v469 = vpop.f32.mrb[0].mxu0
    %470 = vmatprep.mubr.bf16.mxu0 0
    %471 = vmatmul.mubr.bf16.gmra.mrb[0].mxu0 %v341
    %v472 = vpop.f32.mrb[0].mxu0
    %v473 = vadd.f32 %v365, %v472
    %v474 = vpop.f32.mrb[0].mxu0
    %v475 = vpop.f32.mrb[0].mxu0
    %v476 = vadd.f32 %v365, %v475
    %v477 = vpop.f32.mrb[0].mxu0
    %478 = vmatprep.mubr.bf16.mxu0 0
    %479 = vmatmul.mubr.bf16.gmra.mrb[0].mxu0 %v342
    %v480 = vpop.f32.mrb[0].mxu0
    %v481 = vadd.f32 %v365, %v480
    %v482 = vpop.f32.mrb[0].mxu0
    %v483 = vpop.f32.mrb[0].mxu0
    %v484 = vadd.f32 %v365, %v483
    %v485 = vpop.f32.mrb[0].mxu0
    %486 = vmatprep.mubr.bf16.mxu0 0
    %487 = vmatmul.mubr.bf16.gmra.mrb[0].mxu0 %v343
    %v488 = vpop.f32.mrb[0].mxu0
    %v489 = vadd.f32 %v365, %v488
    %v490 = vpop.f32.mrb[0].mxu0
    %v491 = vpop.f32.mrb[0].mxu0
    %v492 = vadd.f32 %v365, %v491
    %v493 = vpop.f32.mrb[0].mxu0
    %494 = vmatprep.mubr.bf16.mxu0 0
    %495 = vmatmul.mubr.bf16.gmra.mrb[0].mxu0 %v344
    %v496 = vpop.f32.mrb[0].mxu0
    %v497 = vadd.f32 %v365, %v496
    %v498 = vpop.f32.mrb[0].mxu0
    %v499 = vpop.f32.mrb[0].mxu0
    %v500 = vadd.f32 %v365, %v499
    %v501 = vpop.f32.mrb[0].mxu0
    %502 = vmatprep.mubr.bf16.mxu0 0
    %503 = vmatmul.mubr.bf16.gmra.mrb[0].mxu0 %v345
    %v504 = vpop.f32.mrb[0].mxu0
    %v505 = vadd.f32 %v365, %v504
    %v506 = vpop.f32.mrb[0].mxu0
    %v507 = vpop.f32.mrb[0].mxu0
    %v508 = vadd.f32 %v365, %v507
    %v509 = vpop.f32.mrb[0].mxu0
    %510 = vdwg.mxu0
    %v511 = vmax.f32 %v449, 0.0
    %v512 = vmax.f32 %v452, 0.0
    %v513 = vmax.f32 %v457, 0.0
    %v514 = vmax.f32 %v460, 0.0
    %v515 = vmax.f32 %v465, 0.0
    %v516 = vmax.f32 %v468, 0.0
    %v517 = vmax.f32 %v473, 0.0
    %v518 = vmax.f32 %v476, 0.0
    %v519 = vmax.f32 %v481, 0.0
    %v520 = vmax.f32 %v484, 0.0
    %v521 = vmax.f32 %v489, 0.0
    %v522 = vmax.f32 %v492, 0.0
    %v523 = vmax.f32 %v497, 0.0
    %v524 = vmax.f32 %v500, 0.0
    %v525 = vmax.f32 %v505, 0.0
    %v526 = vmax.f32 %v508, 0.0
    %v527 = vpack.c.bf16 %v512, %v511
    %v528 = vpack.c.bf16 %v514, %v513
    %v529 = vpack.c.bf16 %v516, %v515
    %v530 = vpack.c.bf16 %v518, %v517
    %v531 = vpack.c.bf16 %v520, %v519
    %v532 = vpack.c.bf16 %v522, %v521
    %v533 = vpack.c.bf16 %v524, %v523
    %v534 = vpack.c.bf16 %v526, %v525
    %535 = vmatprep.subr.bf16.mxu0 0
    %536 = vmatpush1.bf16.msra.mxu0 %v527
    %537 = vmatprep.subr.bf16.mxu0 0
    %538 = vmatpush1.bf16.msra.mxu0 %v528
    %539 = vmatprep.subr.bf16.mxu0 0
    %540 = vmatpush1.bf16.msra.mxu0 %v529
    %541 = vmatprep.subr.bf16.mxu0 0
    %542 = vmatpush1.bf16.msra.mxu0 %v530
    %543 = vmatprep.subr.bf16.mxu0 0
    %544 = vmatpush1.bf16.msra.mxu0 %v531
    %545 = vmatprep.subr.bf16.mxu0 0
    %546 = vmatpush1.bf16.msra.mxu0 %v532
    %547 = vmatprep.subr.bf16.mxu0 0
    %548 = vmatpush1.bf16.msra.mxu0 %v533
    %549 = vmatprep.subr.bf16.mxu0 0
    %550 = vmatpush1.bf16.msra.mxu0 %v534
    %551 = vmatprep.subr.bf16.mxu0 0
    %552 = vmatpush1.bf16.msra.mxu0 0
    %553 = vmatprep.subr.bf16.mxu0 0
    %554 = vmatpush1.bf16.msra.mxu0 0
    %555 = vmatprep.subr.bf16.mxu0 0
    %556 = vmatpush1.bf16.msra.mxu0 0
    %557 = vmatprep.subr.bf16.mxu0 0
    %558 = vmatpush1.bf16.msra.mxu0 0
    %559 = vmatprep.subr.bf16.mxu0 0
    %560 = vmatpush1.bf16.msra.mxu0 0
    %561 = vmatprep.subr.bf16.mxu0 0
    %562 = vmatpush1.bf16.msra.mxu0 0
    %563 = vmatprep.subr.bf16.mxu0 0
    %564 = vmatpush1.bf16.msra.mxu0 0
    %565 = vmatprep.subr.bf16.mxu0 0
    %566 = vmatpush1.bf16.msra.mxu0 0
    %567 = vmatprep.mubr.bf16.mxu0 0
    %568 = vmatmul.mubr.bf16.gmra.mrb[0].mxu0 %v177
    %v569 = vpop.f32.mrb[0].mxu0
    %v570 = vadd.f32 0.0, %v569
    %v571 = vpop.f32.mrb[0].mxu0
    %v572 = vpop.f32.mrb[0].mxu0
    %v573 = vadd.f32 0.0, %v572
    %v574 = vpop.f32.mrb[0].mxu0
    %575 = vmatprep.mubr.bf16.mxu0 0
    %576 = vmatmul.mubr.bf16.gmra.mrb[0].mxu0 %v178
    %v577 = vpop.f32.mrb[0].mxu0
    %v578 = vadd.f32 0.0, %v577
    %v579 = vpop.f32.mrb[0].mxu0
    %v580 = vpop.f32.mrb[0].mxu0
    %v581 = vadd.f32 0.0, %v580
    %v582 = vpop.f32.mrb[0].mxu0
    %583 = vmatprep.mubr.bf16.mxu0 0
    %584 = vmatmul.mubr.bf16.gmra.mrb[0].mxu0 %v179
    %v585 = vpop.f32.mrb[0].mxu0
    %v586 = vadd.f32 0.0, %v585
    %v587 = vpop.f32.mrb[0].mxu0
    %v588 = vpop.f32.mrb[0].mxu0
    %v589 = vadd.f32 0.0, %v588
    %v590 = vpop.f32.mrb[0].mxu0
    %591 = vmatprep.mubr.bf16.mxu0 0
    %592 = vmatmul.mubr.bf16.gmra.mrb[0].mxu0 %v180
    %v593 = vpop.f32.mrb[0].mxu0
    %v594 = vadd.f32 0.0, %v593
    %v595 = vpop.f32.mrb[0].mxu0
    %v596 = vpop.f32.mrb[0].mxu0
    %v597 = vadd.f32 0.0, %v596
    %v598 = vpop.f32.mrb[0].mxu0
    %599 = vmatprep.mubr.bf16.mxu0 0
    %600 = vmatmul.mubr.bf16.gmra.mrb[0].mxu0 %v181
    %v601 = vpop.f32.mrb[0].mxu0
    %v602 = vadd.f32 0.0, %v601
    %v603 = vpop.f32.mrb[0].mxu0
    %v604 = vpop.f32.mrb[0].mxu0
    %v605 = vadd.f32 0.0, %v604
    %v606 = vpop.f32.mrb[0].mxu0
    %607 = vmatprep.mubr.bf16.mxu0 0
    %608 = vmatmul.mubr.bf16.gmra.mrb[0].mxu0 %v182
    %v609 = vpop.f32.mrb[0].mxu0
    %v610 = vadd.f32 0.0, %v609
    %v611 = vpop.f32.mrb[0].mxu0
    %v612 = vpop.f32.mrb[0].mxu0
    %v613 = vadd.f32 0.0, %v612
    %v614 = vpop.f32.mrb[0].mxu0
    %615 = vmatprep.mubr.bf16.mxu0 0
    %616 = vmatmul.mubr.bf16.gmra.mrb[0].mxu0 %v183
    %v617 = vpop.f32.mrb[0].mxu0
    %v618 = vadd.f32 0.0, %v617
    %v619 = vpop.f32.mrb[0].mxu0
    %v620 = vpop.f32.mrb[0].mxu0
    %v621 = vadd.f32 0.0, %v620
    %v622 = vpop.f32.mrb[0].mxu0
    %623 = vmatprep.mubr.bf16.mxu0 0
    %624 = vmatmul.mubr.bf16.gmra.mrb[0].mxu0 %v184
    %v625 = vpop.f32.mrb[0].mxu0
    %v626 = vadd.f32 0.0, %v625
    %v627 = vpop.f32.mrb[0].mxu0
    %v628 = vpop.f32.mrb[0].mxu0
    %v629 = vadd.f32 0.0, %v628
    %v630 = vpop.f32.mrb[0].mxu0
    %631 = vdwg.mxu0
    %v632 = vpack.c.bf16 %v573, %v570
    %v633 = vpack.c.bf16 %v581, %v578
    %v634 = vpack.c.bf16 %v589, %v586
    %v635 = vpack.c.bf16 %v597, %v594
    %v636 = vpack.c.bf16 %v605, %v602
    %v637 = vpack.c.bf16 %v613, %v610
    %v638 = vpack.c.bf16 %v621, %v618
    %v639 = vpack.c.bf16 %v629, %v626
    %v640 = vld [vmem:[#allocation7] sm:$0xf]
    %v641 = vld [vmem:[#allocation7 + $0x4] sm:$0xf]
    %v642 = vld [vmem:[#allocation7 + $0x8] sm:$0xf]
    %v643 = vld [vmem:[#allocation7 + $0xc] sm:$0xf]
    %v644 = vld [vmem:[#allocation7 + $0x10] sm:$0xf]
    %v645 = vld [vmem:[#allocation7 + $0x14] sm:$0xf]
    %v646 = vld [vmem:[#allocation7 + $0x18] sm:$0xf]
    %v647 = vld [vmem:[#allocation7 + $0x1c] sm:$0xf]
    %v648 = vld [vmem:[#allocation7 + $0x20] sm:$0xf]
    %v649 = vld [vmem:[#allocation7 + $0x24] sm:$0xf]
    %v650 = vld [vmem:[#allocation7 + $0x28] sm:$0xf]
    %v651 = vld [vmem:[#allocation7 + $0x2c] sm:$0xf]
    %v652 = vld [vmem:[#allocation7 + $0x30] sm:$0xf]
    %v653 = vld [vmem:[#allocation7 + $0x34] sm:$0xf]
    %v654 = vld [vmem:[#allocation7 + $0x38] sm:$0xf]
    %v655 = vld [vmem:[#allocation7 + $0x3c] sm:$0xf]
    %v656 = vlaneseq
    %v657 = vshrl.u32 %v656, 7
    %v658 = vsub.s32 1, %v657
    %v659 = vrot.slane %v128, %v658
    %v676 = vunpack.c.l.b16 %v640
    %v677 = vunpack.c.l.b16 %v641
    %v678 = vunpack.c.l.b16 %v642
    %v679 = vunpack.c.l.b16 %v643
    %v680 = vunpack.c.l.b16 %v644
    %v681 = vunpack.c.l.b16 %v645
    %v682 = vunpack.c.l.b16 %v646
    %v683 = vunpack.c.l.b16 %v647
    %v684 = vunpack.c.l.b16 %v648
    %v685 = vunpack.c.l.b16 %v649
    %v686 = vunpack.c.l.b16 %v650
    %v687 = vunpack.c.l.b16 %v651
    %v688 = vunpack.c.l.b16 %v652
    %v689 = vunpack.c.l.b16 %v653
    %v690 = vunpack.c.l.b16 %v654
    %v691 = vunpack.c.l.b16 %v655
    %v692 = vpack.c.b16 %v677, %v676
    %v693 = vpack.c.b16 %v679, %v678
    %v694 = vpack.c.b16 %v681, %v680
    %v695 = vpack.c.b16 %v683, %v682
    %v696 = vpack.c.b16 %v685, %v684
    %v697 = vpack.c.b16 %v687, %v686
    %v698 = vpack.c.b16 %v689, %v688
    %v699 = vpack.c.b16 %v691, %v690
    %708 = vmatprep.subr.bf16.mxu0 0
    %709 = vmatpush1.bf16.msra.mxu0 %v692
    %710 = vmatprep.subr.bf16.mxu0 0
    %711 = vmatpush1.bf16.msra.mxu0 %v693
    %712 = vmatprep.subr.bf16.mxu0 0
    %713 = vmatpush1.bf16.msra.mxu0 %v694
    %714 = vmatprep.subr.bf16.mxu0 0
    %715 = vmatpush1.bf16.msra.mxu0 %v695
    %716 = vmatprep.subr.bf16.mxu0 0
    %717 = vmatpush1.bf16.msra.mxu0 %v696
    %718 = vmatprep.subr.bf16.mxu0 0
    %719 = vmatpush1.bf16.msra.mxu0 %v697
    %720 = vmatprep.subr.bf16.mxu0 0
    %721 = vmatpush1.bf16.msra.mxu0 %v698
    %722 = vmatprep.subr.bf16.mxu0 0
    %723 = vmatpush1.bf16.msra.mxu0 %v699
    %724 = vmatprep.subr.bf16.mxu0 0
    %725 = vmatpush1.bf16.msra.mxu0 0
    %726 = vmatprep.subr.bf16.mxu0 0
    %727 = vmatpush1.bf16.msra.mxu0 0
    %728 = vmatprep.subr.bf16.mxu0 0
    %729 = vmatpush1.bf16.msra.mxu0 0
    %730 = vmatprep.subr.bf16.mxu0 0
    %731 = vmatpush1.bf16.msra.mxu0 0
    %732 = vmatprep.subr.bf16.mxu0 0
    %733 = vmatpush1.bf16.msra.mxu0 0
    %734 = vmatprep.subr.bf16.mxu0 0
    %735 = vmatpush1.bf16.msra.mxu0 0
    %736 = vmatprep.subr.bf16.mxu0 0
    %737 = vmatpush1.bf16.msra.mxu0 0
    %738 = vmatprep.subr.bf16.mxu0 0
    %739 = vmatpush1.bf16.msra.mxu0 0
    %740 = vmatprep.mubr.bf16.mxu0 0
    %741 = vmatmul.mubr.bf16.gmra.mrb[0].mxu0 %v632
    %v742 = vpop.f32.mrb[0].mxu0
    %v743 = vadd.f32 %v659, %v742
    %v744 = vpop.f32.mrb[0].mxu0
    %v745 = vpop.f32.mrb[0].mxu0
    %v746 = vadd.f32 %v659, %v745
    %v747 = vpop.f32.mrb[0].mxu0
    %748 = vmatprep.mubr.bf16.mxu0 0
    %749 = vmatmul.mubr.bf16.gmra.mrb[0].mxu0 %v633
    %v750 = vpop.f32.mrb[0].mxu0
    %v751 = vadd.f32 %v659, %v750
    %v752 = vpop.f32.mrb[0].mxu0
    %v753 = vpop.f32.mrb[0].mxu0
    %v754 = vadd.f32 %v659, %v753
    %v755 = vpop.f32.mrb[0].mxu0
    %756 = vmatprep.mubr.bf16.mxu0 0
    %757 = vmatmul.mubr.bf16.gmra.mrb[0].mxu0 %v634
    %v758 = vpop.f32.mrb[0].mxu0
    %v759 = vadd.f32 %v659, %v758
    %v760 = vpop.f32.mrb[0].mxu0
    %v761 = vpop.f32.mrb[0].mxu0
    %v762 = vadd.f32 %v659, %v761
    %v763 = vpop.f32.mrb[0].mxu0
    %764 = vmatprep.mubr.bf16.mxu0 0
    %765 = vmatmul.mubr.bf16.gmra.mrb[0].mxu0 %v635
    %v766 = vpop.f32.mrb[0].mxu0
    %v767 = vadd.f32 %v659, %v766
    %v768 = vpop.f32.mrb[0].mxu0
    %v769 = vpop.f32.mrb[0].mxu0
    %v770 = vadd.f32 %v659, %v769
    %v771 = vpop.f32.mrb[0].mxu0
    %772 = vmatprep.mubr.bf16.mxu0 0
    %773 = vmatmul.mubr.bf16.gmra.mrb[0].mxu0 %v636
    %v774 = vpop.f32.mrb[0].mxu0
    %v775 = vadd.f32 %v659, %v774
    %v776 = vpop.f32.mrb[0].mxu0
    %v777 = vpop.f32.mrb[0].mxu0
    %v778 = vadd.f32 %v659, %v777
    %v779 = vpop.f32.mrb[0].mxu0
    %780 = vmatprep.mubr.bf16.mxu0 0
    %781 = vmatmul.mubr.bf16.gmra.mrb[0].mxu0 %v637
    %v782 = vpop.f32.mrb[0].mxu0
    %v783 = vadd.f32 %v659, %v782
    %v784 = vpop.f32.mrb[0].mxu0
    %v785 = vpop.f32.mrb[0].mxu0
    %v786 = vadd.f32 %v659, %v785
    %v787 = vpop.f32.mrb[0].mxu0
    %788 = vmatprep.mubr.bf16.mxu0 0
    %789 = vmatmul.mubr.bf16.gmra.mrb[0].mxu0 %v638
    %v790 = vpop.f32.mrb[0].mxu0
    %v791 = vadd.f32 %v659, %v790
    %v792 = vpop.f32.mrb[0].mxu0
    %v793 = vpop.f32.mrb[0].mxu0
    %v794 = vadd.f32 %v659, %v793
    %v795 = vpop.f32.mrb[0].mxu0
    %796 = vmatprep.mubr.bf16.mxu0 0
    %797 = vmatmul.mubr.bf16.gmra.mrb[0].mxu0 %v639
    %v798 = vpop.f32.mrb[0].mxu0
    %v799 = vadd.f32 %v659, %v798
    %v800 = vpop.f32.mrb[0].mxu0
    %v801 = vpop.f32.mrb[0].mxu0
    %v802 = vadd.f32 %v659, %v801
    %v803 = vpop.f32.mrb[0].mxu0
    %804 = vdwg.mxu0
    %v805 = vmax.f32 %v743, 0.0
    %v806 = vmax.f32 %v746, 0.0
    %v807 = vmax.f32 %v751, 0.0
    %v808 = vmax.f32 %v754, 0.0
    %v809 = vmax.f32 %v759, 0.0
    %v810 = vmax.f32 %v762, 0.0
    %v811 = vmax.f32 %v767, 0.0
    %v812 = vmax.f32 %v770, 0.0
    %v813 = vmax.f32 %v775, 0.0
    %v814 = vmax.f32 %v778, 0.0
    %v815 = vmax.f32 %v783, 0.0
    %v816 = vmax.f32 %v786, 0.0
    %v817 = vmax.f32 %v791, 0.0
    %v818 = vmax.f32 %v794, 0.0
    %v819 = vmax.f32 %v799, 0.0
    %v820 = vmax.f32 %v802, 0.0
    %v821 = vpack.c.bf16 %v806, %v805
    %v822 = vpack.c.bf16 %v808, %v807
    %v823 = vpack.c.bf16 %v810, %v809
    %v824 = vpack.c.bf16 %v812, %v811
    %v825 = vpack.c.bf16 %v814, %v813
    %v826 = vpack.c.bf16 %v816, %v815
    %v827 = vpack.c.bf16 %v818, %v817
    %v828 = vpack.c.bf16 %v820, %v819
    %829 = vmatprep.subr.bf16.mxu0 0
    %830 = vmatpush1.bf16.msra.mxu0 %v821
    %831 = vmatprep.subr.bf16.mxu0 0
    %832 = vmatpush1.bf16.msra.mxu0 %v822
    %833 = vmatprep.subr.bf16.mxu0 0
    %834 = vmatpush1.bf16.msra.mxu0 %v823
    %835 = vmatprep.subr.bf16.mxu0 0
    %836 = vmatpush1.bf16.msra.mxu0 %v824
    %837 = vmatprep.subr.bf16.mxu0 0
    %838 = vmatpush1.bf16.msra.mxu0 %v825
    %839 = vmatprep.subr.bf16.mxu0 0
    %840 = vmatpush1.bf16.msra.mxu0 %v826
    %841 = vmatprep.subr.bf16.mxu0 0
    %842 = vmatpush1.bf16.msra.mxu0 %v827
    %843 = vmatprep.subr.bf16.mxu0 0
    %844 = vmatpush1.bf16.msra.mxu0 %v828
    %845 = vmatprep.subr.bf16.mxu0 0
    %846 = vmatpush1.bf16.msra.mxu0 0
    %847 = vmatprep.subr.bf16.mxu0 0
    %848 = vmatpush1.bf16.msra.mxu0 0
    %849 = vmatprep.subr.bf16.mxu0 0
    %850 = vmatpush1.bf16.msra.mxu0 0
    %851 = vmatprep.subr.bf16.mxu0 0
    %852 = vmatpush1.bf16.msra.mxu0 0
    %853 = vmatprep.subr.bf16.mxu0 0
    %854 = vmatpush1.bf16.msra.mxu0 0
    %855 = vmatprep.subr.bf16.mxu0 0
    %856 = vmatpush1.bf16.msra.mxu0 0
    %857 = vmatprep.subr.bf16.mxu0 0
    %858 = vmatpush1.bf16.msra.mxu0 0
    %859 = vmatprep.subr.bf16.mxu0 0
    %860 = vmatpush1.bf16.msra.mxu0 0
    %861 = vmatprep.mubr.bf16.mxu0 0
    %862 = vmatmul.mubr.bf16.gmra.mrb[0].mxu0 %v177
    %v863 = vpop.f32.mrb[0].mxu0
    %v864 = vadd.f32 0.0, %v863
    %v865 = vpop.f32.mrb[0].mxu0
    %v866 = vpop.f32.mrb[0].mxu0
    %v867 = vadd.f32 0.0, %v866
    %v868 = vpop.f32.mrb[0].mxu0
    %869 = vmatprep.mubr.bf16.mxu0 0
    %870 = vmatmul.mubr.bf16.gmra.mrb[0].mxu0 %v178
    %v871 = vpop.f32.mrb[0].mxu0
    %v872 = vadd.f32 0.0, %v871
    %v873 = vpop.f32.mrb[0].mxu0
    %v874 = vpop.f32.mrb[0].mxu0
    %v875 = vadd.f32 0.0, %v874
    %v876 = vpop.f32.mrb[0].mxu0
    %877 = vmatprep.mubr.bf16.mxu0 0
    %878 = vmatmul.mubr.bf16.gmra.mrb[0].mxu0 %v179
    %v879 = vpop.f32.mrb[0].mxu0
    %v880 = vadd.f32 0.0, %v879
    %v881 = vpop.f32.mrb[0].mxu0
    %v882 = vpop.f32.mrb[0].mxu0
    %v883 = vadd.f32 0.0, %v882
    %v884 = vpop.f32.mrb[0].mxu0
    %885 = vmatprep.mubr.bf16.mxu0 0
    %886 = vmatmul.mubr.bf16.gmra.mrb[0].mxu0 %v180
    %v887 = vpop.f32.mrb[0].mxu0
    %v888 = vadd.f32 0.0, %v887
    %v889 = vpop.f32.mrb[0].mxu0
    %v890 = vpop.f32.mrb[0].mxu0
    %v891 = vadd.f32 0.0, %v890
    %v892 = vpop.f32.mrb[0].mxu0
    %893 = vmatprep.mubr.bf16.mxu0 0
    %894 = vmatmul.mubr.bf16.gmra.mrb[0].mxu0 %v181
    %v895 = vpop.f32.mrb[0].mxu0
    %v896 = vadd.f32 0.0, %v895
    %v897 = vpop.f32.mrb[0].mxu0
    %v898 = vpop.f32.mrb[0].mxu0
    %v899 = vadd.f32 0.0, %v898
    %v900 = vpop.f32.mrb[0].mxu0
    %901 = vmatprep.mubr.bf16.mxu0 0
    %902 = vmatmul.mubr.bf16.gmra.mrb[0].mxu0 %v182
    %v903 = vpop.f32.mrb[0].mxu0
    %v904 = vadd.f32 0.0, %v903
    %v905 = vpop.f32.mrb[0].mxu0
    %v906 = vpop.f32.mrb[0].mxu0
    %v907 = vadd.f32 0.0, %v906
    %v908 = vpop.f32.mrb[0].mxu0
    %909 = vmatprep.mubr.bf16.mxu0 0
    %910 = vmatmul.mubr.bf16.gmra.mrb[0].mxu0 %v183
    %v911 = vpop.f32.mrb[0].mxu0
    %v912 = vadd.f32 0.0, %v911
    %v913 = vpop.f32.mrb[0].mxu0
    %v914 = vpop.f32.mrb[0].mxu0
    %v915 = vadd.f32 0.0, %v914
    %v916 = vpop.f32.mrb[0].mxu0
    %917 = vmatprep.mubr.bf16.mxu0 0
    %918 = vmatmul.mubr.bf16.gmra.mrb[0].mxu0 %v184
    %v919 = vpop.f32.mrb[0].mxu0
    %v920 = vadd.f32 0.0, %v919
    %v921 = vpop.f32.mrb[0].mxu0
    %v922 = vpop.f32.mrb[0].mxu0
    %v923 = vadd.f32 0.0, %v922
    %v924 = vpop.f32.mrb[0].mxu0
    %925 = vdwg.mxu0
    %v926 = vpack.c.bf16 %v867, %v864
    %v927 = vpack.c.bf16 %v875, %v872
    %v928 = vpack.c.bf16 %v883, %v880
    %v929 = vpack.c.bf16 %v891, %v888
    %v930 = vpack.c.bf16 %v899, %v896
    %v931 = vpack.c.bf16 %v907, %v904
    %v932 = vpack.c.bf16 %v915, %v912
    %v933 = vpack.c.bf16 %v923, %v920
    %v934 = vld [vmem:[#allocation9] sm:$0xf]
    %v935 = vld [vmem:[#allocation9 + $0x4] sm:$0xf]
    %v936 = vld [vmem:[#allocation9 + $0x8] sm:$0xf]
    %v937 = vld [vmem:[#allocation9 + $0xc] sm:$0xf]
    %v938 = vld [vmem:[#allocation9 + $0x10] sm:$0xf]
    %v939 = vld [vmem:[#allocation9 + $0x14] sm:$0xf]
    %v940 = vld [vmem:[#allocation9 + $0x18] sm:$0xf]
    %v941 = vld [vmem:[#allocation9 + $0x1c] sm:$0xf]
    %v942 = vld [vmem:[#allocation9 + $0x20] sm:$0xf]
    %v943 = vld [vmem:[#allocation9 + $0x24] sm:$0xf]
    %v944 = vld [vmem:[#allocation9 + $0x28] sm:$0xf]
    %v945 = vld [vmem:[#allocation9 + $0x2c] sm:$0xf]
    %v946 = vld [vmem:[#allocation9 + $0x30] sm:$0xf]
    %v947 = vld [vmem:[#allocation9 + $0x34] sm:$0xf]
    %v948 = vld [vmem:[#allocation9 + $0x38] sm:$0xf]
    %v949 = vld [vmem:[#allocation9 + $0x3c] sm:$0xf]
    %v950 = vlaneseq
    %v951 = vshrl.u32 %v950, 7
    %v952 = vsub.s32 2, %v951
    %v953 = vrot.slane %v128, %v952
    %v970 = vunpack.c.l.b16 %v934
    %v971 = vunpack.c.l.b16 %v935
    %v972 = vunpack.c.l.b16 %v936
    %v973 = vunpack.c.l.b16 %v937
    %v974 = vunpack.c.l.b16 %v938
    %v975 = vunpack.c.l.b16 %v939
    %v976 = vunpack.c.l.b16 %v940
    %v977 = vunpack.c.l.b16 %v941
    %v978 = vunpack.c.l.b16 %v942
    %v979 = vunpack.c.l.b16 %v943
    %v980 = vunpack.c.l.b16 %v944
    %v981 = vunpack.c.l.b16 %v945
    %v982 = vunpack.c.l.b16 %v946
    %v983 = vunpack.c.l.b16 %v947
    %v984 = vunpack.c.l.b16 %v948
    %v985 = vunpack.c.l.b16 %v949
    %v986 = vpack.c.b16 %v971, %v970
    %v987 = vpack.c.b16 %v973, %v972
    %v988 = vpack.c.b16 %v975, %v974
    %v989 = vpack.c.b16 %v977, %v976
    %v990 = vpack.c.b16 %v979, %v978
    %v991 = vpack.c.b16 %v981, %v980
    %v992 = vpack.c.b16 %v983, %v982
    %v993 = vpack.c.b16 %v985, %v984
    %1002 = vmatprep.subr.bf16.mxu0 0
    %1003 = vmatpush1.bf16.msra.mxu0 %v986
    %1004 = vmatprep.subr.bf16.mxu0 0
    %1005 = vmatpush1.bf16.msra.mxu0 %v987
    %1006 = vmatprep.subr.bf16.mxu0 0
    %1007 = vmatpush1.bf16.msra.mxu0 %v988
    %1008 = vmatprep.subr.bf16.mxu0 0
    %1009 = vmatpush1.bf16.msra.mxu0 %v989
    %1010 = vmatprep.subr.bf16.mxu0 0
    %1011 = vmatpush1.bf16.msra.mxu0 %v990
    %1012 = vmatprep.subr.bf16.mxu0 0
    %1013 = vmatpush1.bf16.msra.mxu0 %v991
    %1014 = vmatprep.subr.bf16.mxu0 0
    %1015 = vmatpush1.bf16.msra.mxu0 %v992
    %1016 = vmatprep.subr.bf16.mxu0 0
    %1017 = vmatpush1.bf16.msra.mxu0 %v993
    %1018 = vmatprep.subr.bf16.mxu0 0
    %1019 = vmatpush1.bf16.msra.mxu0 0
    %1020 = vmatprep.subr.bf16.mxu0 0
    %1021 = vmatpush1.bf16.msra.mxu0 0
    %1022 = vmatprep.subr.bf16.mxu0 0
    %1023 = vmatpush1.bf16.msra.mxu0 0
    %1024 = vmatprep.subr.bf16.mxu0 0
    %1025 = vmatpush1.bf16.msra.mxu0 0
    %1026 = vmatprep.subr.bf16.mxu0 0
    %1027 = vmatpush1.bf16.msra.mxu0 0
    %1028 = vmatprep.subr.bf16.mxu0 0
    %1029 = vmatpush1.bf16.msra.mxu0 0
    %1030 = vmatprep.subr.bf16.mxu0 0
    %1031 = vmatpush1.bf16.msra.mxu0 0
    %1032 = vmatprep.subr.bf16.mxu0 0
    %1033 = vmatpush1.bf16.msra.mxu0 0
    %1034 = vmatprep.mubr.bf16.mxu0 0
    %1035 = vmatmul.mubr.bf16.gmra.mrb[0].mxu0 %v926
    %v1036 = vpop.f32.mrb[0].mxu0
    %v1037 = vadd.f32 %v953, %v1036
    %v1038 = vpop.f32.mrb[0].mxu0
    %v1039 = vpop.f32.mrb[0].mxu0
    %v1040 = vadd.f32 %v953, %v1039
    %v1041 = vpop.f32.mrb[0].mxu0
    %1042 = vmatprep.mubr.bf16.mxu0 0
    %1043 = vmatmul.mubr.bf16.gmra.mrb[0].mxu0 %v927
    %v1044 = vpop.f32.mrb[0].mxu0
    %v1045 = vadd.f32 %v953, %v1044
    %v1046 = vpop.f32.mrb[0].mxu0
    %v1047 = vpop.f32.mrb[0].mxu0
    %v1048 = vadd.f32 %v953, %v1047
    %v1049 = vpop.f32.mrb[0].mxu0
    %1050 = vmatprep.mubr.bf16.mxu0 0
    %1051 = vmatmul.mubr.bf16.gmra.mrb[0].mxu0 %v928
    %v1052 = vpop.f32.mrb[0].mxu0
    %v1053 = vadd.f32 %v953, %v1052
    %v1054 = vpop.f32.mrb[0].mxu0
    %v1055 = vpop.f32.mrb[0].mxu0
    %v1056 = vadd.f32 %v953, %v1055
    %v1057 = vpop.f32.mrb[0].mxu0
    %1058 = vmatprep.mubr.bf16.mxu0 0
    %1059 = vmatmul.mubr.bf16.gmra.mrb[0].mxu0 %v929
    %v1060 = vpop.f32.mrb[0].mxu0
    %v1061 = vadd.f32 %v953, %v1060
    %v1062 = vpop.f32.mrb[0].mxu0
    %v1063 = vpop.f32.mrb[0].mxu0
    %v1064 = vadd.f32 %v953, %v1063
    %v1065 = vpop.f32.mrb[0].mxu0
    %1066 = vmatprep.mubr.bf16.mxu0 0
    %1067 = vmatmul.mubr.bf16.gmra.mrb[0].mxu0 %v930
    %v1068 = vpop.f32.mrb[0].mxu0
    %v1069 = vadd.f32 %v953, %v1068
    %v1070 = vpop.f32.mrb[0].mxu0
    %v1071 = vpop.f32.mrb[0].mxu0
    %v1072 = vadd.f32 %v953, %v1071
    %v1073 = vpop.f32.mrb[0].mxu0
    %1074 = vmatprep.mubr.bf16.mxu0 0
    %1075 = vmatmul.mubr.bf16.gmra.mrb[0].mxu0 %v931
    %v1076 = vpop.f32.mrb[0].mxu0
    %v1077 = vadd.f32 %v953, %v1076
    %v1078 = vpop.f32.mrb[0].mxu0
    %v1079 = vpop.f32.mrb[0].mxu0
    %v1080 = vadd.f32 %v953, %v1079
    %v1081 = vpop.f32.mrb[0].mxu0
    %1082 = vmatprep.mubr.bf16.mxu0 0
    %1083 = vmatmul.mubr.bf16.gmra.mrb[0].mxu0 %v932
    %v1084 = vpop.f32.mrb[0].mxu0
    %v1085 = vadd.f32 %v953, %v1084
    %v1086 = vpop.f32.mrb[0].mxu0
    %v1087 = vpop.f32.mrb[0].mxu0
    %v1088 = vadd.f32 %v953, %v1087
    %v1089 = vpop.f32.mrb[0].mxu0
    %1090 = vmatprep.mubr.bf16.mxu0 0
    %1091 = vmatmul.mubr.bf16.gmra.mrb[0].mxu0 %v933
    %v1092 = vpop.f32.mrb[0].mxu0
    %v1093 = vadd.f32 %v953, %v1092
    %v1094 = vpop.f32.mrb[0].mxu0
    %v1095 = vpop.f32.mrb[0].mxu0
    %v1096 = vadd.f32 %v953, %v1095
    %v1097 = vpop.f32.mrb[0].mxu0
    %1098 = vdwg.mxu0
    %v1099 = vmax.f32 %v1037, 0.0
    %v1100 = vmax.f32 %v1040, 0.0
    %v1101 = vmax.f32 %v1045, 0.0
    %v1102 = vmax.f32 %v1048, 0.0
    %v1103 = vmax.f32 %v1053, 0.0
    %v1104 = vmax.f32 %v1056, 0.0
    %v1105 = vmax.f32 %v1061, 0.0
    %v1106 = vmax.f32 %v1064, 0.0
    %v1107 = vmax.f32 %v1069, 0.0
    %v1108 = vmax.f32 %v1072, 0.0
    %v1109 = vmax.f32 %v1077, 0.0
    %v1110 = vmax.f32 %v1080, 0.0
    %v1111 = vmax.f32 %v1085, 0.0
    %v1112 = vmax.f32 %v1088, 0.0
    %v1113 = vmax.f32 %v1093, 0.0
    %v1114 = vmax.f32 %v1096, 0.0
    %v1115 = vpack.c.bf16 %v1100, %v1099
    %v1116 = vpack.c.bf16 %v1102, %v1101
    %v1117 = vpack.c.bf16 %v1104, %v1103
    %v1118 = vpack.c.bf16 %v1106, %v1105
    %v1119 = vpack.c.bf16 %v1108, %v1107
    %v1120 = vpack.c.bf16 %v1110, %v1109
    %v1121 = vpack.c.bf16 %v1112, %v1111
    %v1122 = vpack.c.bf16 %v1114, %v1113
    %1123 = vmatprep.subr.bf16.mxu0 0
    %1124 = vmatpush1.bf16.msra.mxu0 %v1115
    %1125 = vmatprep.subr.bf16.mxu0 0
    %1126 = vmatpush1.bf16.msra.mxu0 %v1116
    %1127 = vmatprep.subr.bf16.mxu0 0
    %1128 = vmatpush1.bf16.msra.mxu0 %v1117
    %1129 = vmatprep.subr.bf16.mxu0 0
    %1130 = vmatpush1.bf16.msra.mxu0 %v1118
    %1131 = vmatprep.subr.bf16.mxu0 0
    %1132 = vmatpush1.bf16.msra.mxu0 %v1119
    %1133 = vmatprep.subr.bf16.mxu0 0
    %1134 = vmatpush1.bf16.msra.mxu0 %v1120
    %1135 = vmatprep.subr.bf16.mxu0 0
    %1136 = vmatpush1.bf16.msra.mxu0 %v1121
    %1137 = vmatprep.subr.bf16.mxu0 0
    %1138 = vmatpush1.bf16.msra.mxu0 %v1122
    %1139 = vmatprep.subr.bf16.mxu0 0
    %1140 = vmatpush1.bf16.msra.mxu0 0
    %1141 = vmatprep.subr.bf16.mxu0 0
    %1142 = vmatpush1.bf16.msra.mxu0 0
    %1143 = vmatprep.subr.bf16.mxu0 0
    %1144 = vmatpush1.bf16.msra.mxu0 0
    %1145 = vmatprep.subr.bf16.mxu0 0
    %1146 = vmatpush1.bf16.msra.mxu0 0
    %1147 = vmatprep.subr.bf16.mxu0 0
    %1148 = vmatpush1.bf16.msra.mxu0 0
    %1149 = vmatprep.subr.bf16.mxu0 0
    %1150 = vmatpush1.bf16.msra.mxu0 0
    %1151 = vmatprep.subr.bf16.mxu0 0
    %1152 = vmatpush1.bf16.msra.mxu0 0
    %1153 = vmatprep.subr.bf16.mxu0 0
    %1154 = vmatpush1.bf16.msra.mxu0 0
    %1155 = vmatprep.mubr.bf16.mxu0 0
    %1156 = vmatmul.mubr.bf16.gmra.mrb[0].mxu0 %v177
    %v1157 = vpop.f32.mrb[0].mxu0
    %v1158 = vadd.f32 0.0, %v1157
    %v1159 = vpop.f32.mrb[0].mxu0
    %v1160 = vpop.f32.mrb[0].mxu0
    %v1161 = vadd.f32 0.0, %v1160
    %v1162 = vpop.f32.mrb[0].mxu0
    %1163 = vmatprep.mubr.bf16.mxu0 0
    %1164 = vmatmul.mubr.bf16.gmra.mrb[0].mxu0 %v178
    %v1165 = vpop.f32.mrb[0].mxu0
    %v1166 = vadd.f32 0.0, %v1165
    %v1167 = vpop.f32.mrb[0].mxu0
    %v1168 = vpop.f32.mrb[0].mxu0
    %v1169 = vadd.f32 0.0, %v1168
    %v1170 = vpop.f32.mrb[0].mxu0
    %1171 = vmatprep.mubr.bf16.mxu0 0
    %1172 = vmatmul.mubr.bf16.gmra.mrb[0].mxu0 %v179
    %v1173 = vpop.f32.mrb[0].mxu0
    %v1174 = vadd.f32 0.0, %v1173
    %v1175 = vpop.f32.mrb[0].mxu0
    %v1176 = vpop.f32.mrb[0].mxu0
    %v1177 = vadd.f32 0.0, %v1176
    %v1178 = vpop.f32.mrb[0].mxu0
    %1179 = vmatprep.mubr.bf16.mxu0 0
    %1180 = vmatmul.mubr.bf16.gmra.mrb[0].mxu0 %v180
    %v1181 = vpop.f32.mrb[0].mxu0
    %v1182 = vadd.f32 0.0, %v1181
    %v1183 = vpop.f32.mrb[0].mxu0
    %v1184 = vpop.f32.mrb[0].mxu0
    %v1185 = vadd.f32 0.0, %v1184
    %v1186 = vpop.f32.mrb[0].mxu0
    %1187 = vmatprep.mubr.bf16.mxu0 0
    %1188 = vmatmul.mubr.bf16.gmra.mrb[0].mxu0 %v181
    %v1189 = vpop.f32.mrb[0].mxu0
    %v1190 = vadd.f32 0.0, %v1189
    %v1191 = vpop.f32.mrb[0].mxu0
    %v1192 = vpop.f32.mrb[0].mxu0
    %v1193 = vadd.f32 0.0, %v1192
    %v1194 = vpop.f32.mrb[0].mxu0
    %1195 = vmatprep.mubr.bf16.mxu0 0
    %1196 = vmatmul.mubr.bf16.gmra.mrb[0].mxu0 %v182
    %v1197 = vpop.f32.mrb[0].mxu0
    %v1198 = vadd.f32 0.0, %v1197
    %v1199 = vpop.f32.mrb[0].mxu0
    %v1200 = vpop.f32.mrb[0].mxu0
    %v1201 = vadd.f32 0.0, %v1200
    %v1202 = vpop.f32.mrb[0].mxu0
    %1203 = vmatprep.mubr.bf16.mxu0 0
    %1204 = vmatmul.mubr.bf16.gmra.mrb[0].mxu0 %v183
    %v1205 = vpop.f32.mrb[0].mxu0
    %v1206 = vadd.f32 0.0, %v1205
    %v1207 = vpop.f32.mrb[0].mxu0
    %v1208 = vpop.f32.mrb[0].mxu0
    %v1209 = vadd.f32 0.0, %v1208
    %v1210 = vpop.f32.mrb[0].mxu0
    %1211 = vmatprep.mubr.bf16.mxu0 0
    %1212 = vmatmul.mubr.bf16.gmra.mrb[0].mxu0 %v184
    %v1213 = vpop.f32.mrb[0].mxu0
    %v1214 = vadd.f32 0.0, %v1213
    %v1215 = vpop.f32.mrb[0].mxu0
    %v1216 = vpop.f32.mrb[0].mxu0
    %v1217 = vadd.f32 0.0, %v1216
    %v1218 = vpop.f32.mrb[0].mxu0
    %1219 = vdwg.mxu0
    %v1220 = vpack.c.bf16 %v1161, %v1158
    %v1221 = vpack.c.bf16 %v1169, %v1166
    %v1222 = vpack.c.bf16 %v1177, %v1174
    %v1223 = vpack.c.bf16 %v1185, %v1182
    %v1224 = vpack.c.bf16 %v1193, %v1190
    %v1225 = vpack.c.bf16 %v1201, %v1198
    %v1226 = vpack.c.bf16 %v1209, %v1206
    %v1227 = vpack.c.bf16 %v1217, %v1214
    %v1228 = vld [vmem:[#allocation10] sm:$0xf]
    %v1229 = vld [vmem:[#allocation10 + $0x4] sm:$0xf]
    %v1230 = vld [vmem:[#allocation10 + $0x8] sm:$0xf]
    %v1231 = vld [vmem:[#allocation10 + $0xc] sm:$0xf]
    %v1232 = vld [vmem:[#allocation10 + $0x10] sm:$0xf]
    %v1233 = vld [vmem:[#allocation10 + $0x14] sm:$0xf]
    %v1234 = vld [vmem:[#allocation10 + $0x18] sm:$0xf]
    %v1235 = vld [vmem:[#allocation10 + $0x1c] sm:$0xf]
    %v1236 = vld [vmem:[#allocation10 + $0x20] sm:$0xf]
    %v1237 = vld [vmem:[#allocation10 + $0x24] sm:$0xf]
    %v1238 = vld [vmem:[#allocation10 + $0x28] sm:$0xf]
    %v1239 = vld [vmem:[#allocation10 + $0x2c] sm:$0xf]
    %v1240 = vld [vmem:[#allocation10 + $0x30] sm:$0xf]
    %v1241 = vld [vmem:[#allocation10 + $0x34] sm:$0xf]
    %v1242 = vld [vmem:[#allocation10 + $0x38] sm:$0xf]
    %v1243 = vld [vmem:[#allocation10 + $0x3c] sm:$0xf]
    %v1244 = vlaneseq
    %v1245 = vshrl.u32 %v1244, 7
    %v1246 = vsub.s32 3, %v1245
    %v1247 = vrot.slane %v128, %v1246
    %v1264 = vunpack.c.l.b16 %v1228
    %v1265 = vunpack.c.l.b16 %v1229
    %v1266 = vunpack.c.l.b16 %v1230
    %v1267 = vunpack.c.l.b16 %v1231
    %v1268 = vunpack.c.l.b16 %v1232
    %v1269 = vunpack.c.l.b16 %v1233
    %v1270 = vunpack.c.l.b16 %v1234
    %v1271 = vunpack.c.l.b16 %v1235
    %v1272 = vunpack.c.l.b16 %v1236
    %v1273 = vunpack.c.l.b16 %v1237
    %v1274 = vunpack.c.l.b16 %v1238
    %v1275 = vunpack.c.l.b16 %v1239
    %v1276 = vunpack.c.l.b16 %v1240
    %v1277 = vunpack.c.l.b16 %v1241
    %v1278 = vunpack.c.l.b16 %v1242
    %v1279 = vunpack.c.l.b16 %v1243
    %v1280 = vpack.c.b16 %v1265, %v1264
    %v1281 = vpack.c.b16 %v1267, %v1266
    %v1282 = vpack.c.b16 %v1269, %v1268
    %v1283 = vpack.c.b16 %v1271, %v1270
    %v1284 = vpack.c.b16 %v1273, %v1272
    %v1285 = vpack.c.b16 %v1275, %v1274
    %v1286 = vpack.c.b16 %v1277, %v1276
    %v1287 = vpack.c.b16 %v1279, %v1278
    %1296 = vmatprep.subr.bf16.mxu0 0
    %1297 = vmatpush1.bf16.msra.mxu0 %v1280
    %1298 = vmatprep.subr.bf16.mxu0 0
    %1299 = vmatpush1.bf16.msra.mxu0 %v1281
    %1300 = vmatprep.subr.bf16.mxu0 0
    %1301 = vmatpush1.bf16.msra.mxu0 %v1282
    %1302 = vmatprep.subr.bf16.mxu0 0
    %1303 = vmatpush1.bf16.msra.mxu0 %v1283
    %1304 = vmatprep.subr.bf16.mxu0 0
    %1305 = vmatpush1.bf16.msra.mxu0 %v1284
    %1306 = vmatprep.subr.bf16.mxu0 0
    %1307 = vmatpush1.bf16.msra.mxu0 %v1285
    %1308 = vmatprep.subr.bf16.mxu0 0
    %1309 = vmatpush1.bf16.msra.mxu0 %v1286
    %1310 = vmatprep.subr.bf16.mxu0 0
    %1311 = vmatpush1.bf16.msra.mxu0 %v1287
    %1312 = vmatprep.subr.bf16.mxu0 0
    %1313 = vmatpush1.bf16.msra.mxu0 0
    %1314 = vmatprep.subr.bf16.mxu0 0
    %1315 = vmatpush1.bf16.msra.mxu0 0
    %1316 = vmatprep.subr.bf16.mxu0 0
    %1317 = vmatpush1.bf16.msra.mxu0 0
    %1318 = vmatprep.subr.bf16.mxu0 0
    %1319 = vmatpush1.bf16.msra.mxu0 0
    %1320 = vmatprep.subr.bf16.mxu0 0
    %1321 = vmatpush1.bf16.msra.mxu0 0
    %1322 = vmatprep.subr.bf16.mxu0 0
    %1323 = vmatpush1.bf16.msra.mxu0 0
    %1324 = vmatprep.subr.bf16.mxu0 0
    %1325 = vmatpush1.bf16.msra.mxu0 0
    %1326 = vmatprep.subr.bf16.mxu0 0
    %1327 = vmatpush1.bf16.msra.mxu0 0
    %1328 = vmatprep.mubr.bf16.mxu0 0
    %1329 = vmatmul.mubr.bf16.gmra.mrb[0].mxu0 %v1220
    %v1330 = vpop.f32.mrb[0].mxu0
    %v1331 = vadd.f32 %v1247, %v1330
    %v1332 = vpop.f32.mrb[0].mxu0
    %v1333 = vpop.f32.mrb[0].mxu0
    %v1334 = vadd.f32 %v1247, %v1333
    %v1335 = vpop.f32.mrb[0].mxu0
    %1336 = vmatprep.mubr.bf16.mxu0 0
    %1337 = vmatmul.mubr.bf16.gmra.mrb[0].mxu0 %v1221
    %v1338 = vpop.f32.mrb[0].mxu0
    %v1339 = vadd.f32 %v1247, %v1338
    %v1340 = vpop.f32.mrb[0].mxu0
    %v1341 = vpop.f32.mrb[0].mxu0
    %v1342 = vadd.f32 %v1247, %v1341
    %v1343 = vpop.f32.mrb[0].mxu0
    %1344 = vmatprep.mubr.bf16.mxu0 0
    %1345 = vmatmul.mubr.bf16.gmra.mrb[0].mxu0 %v1222
    %v1346 = vpop.f32.mrb[0].mxu0
    %v1347 = vadd.f32 %v1247, %v1346
    %v1348 = vpop.f32.mrb[0].mxu0
    %v1349 = vpop.f32.mrb[0].mxu0
    %v1350 = vadd.f32 %v1247, %v1349
    %v1351 = vpop.f32.mrb[0].mxu0
    %1352 = vmatprep.mubr.bf16.mxu0 0
    %1353 = vmatmul.mubr.bf16.gmra.mrb[0].mxu0 %v1223
    %v1354 = vpop.f32.mrb[0].mxu0
    %v1355 = vadd.f32 %v1247, %v1354
    %v1356 = vpop.f32.mrb[0].mxu0
    %v1357 = vpop.f32.mrb[0].mxu0
    %v1358 = vadd.f32 %v1247, %v1357
    %v1359 = vpop.f32.mrb[0].mxu0
    %1360 = vmatprep.mubr.bf16.mxu0 0
    %1361 = vmatmul.mubr.bf16.gmra.mrb[0].mxu0 %v1224
    %v1362 = vpop.f32.mrb[0].mxu0
    %v1363 = vadd.f32 %v1247, %v1362
    %v1364 = vpop.f32.mrb[0].mxu0
    %v1365 = vpop.f32.mrb[0].mxu0
    %v1366 = vadd.f32 %v1247, %v1365
    %v1367 = vpop.f32.mrb[0].mxu0
    %1368 = vmatprep.mubr.bf16.mxu0 0
    %1369 = vmatmul.mubr.bf16.gmra.mrb[0].mxu0 %v1225
    %v1370 = vpop.f32.mrb[0].mxu0
    %v1371 = vadd.f32 %v1247, %v1370
    %v1372 = vpop.f32.mrb[0].mxu0
    %v1373 = vpop.f32.mrb[0].mxu0
    %v1374 = vadd.f32 %v1247, %v1373
    %v1375 = vpop.f32.mrb[0].mxu0
    %1376 = vmatprep.mubr.bf16.mxu0 0
    %1377 = vmatmul.mubr.bf16.gmra.mrb[0].mxu0 %v1226
    %v1378 = vpop.f32.mrb[0].mxu0
    %v1379 = vadd.f32 %v1247, %v1378
    %v1380 = vpop.f32.mrb[0].mxu0
    %v1381 = vpop.f32.mrb[0].mxu0
    %v1382 = vadd.f32 %v1247, %v1381
    %v1383 = vpop.f32.mrb[0].mxu0
    %1384 = vmatprep.mubr.bf16.mxu0 0
    %1385 = vmatmul.mubr.bf16.gmra.mrb[0].mxu0 %v1227
    %v1386 = vpop.f32.mrb[0].mxu0
    %v1387 = vadd.f32 %v1247, %v1386
    %v1388 = vpop.f32.mrb[0].mxu0
    %v1389 = vpop.f32.mrb[0].mxu0
    %v1390 = vadd.f32 %v1247, %v1389
    %v1391 = vpop.f32.mrb[0].mxu0
    %1392 = vdwg.mxu0
    %v1393 = vmax.f32 %v1331, 0.0
    %v1394 = vmax.f32 %v1334, 0.0
    %v1395 = vmax.f32 %v1339, 0.0
    %v1396 = vmax.f32 %v1342, 0.0
    %v1397 = vmax.f32 %v1347, 0.0
    %v1398 = vmax.f32 %v1350, 0.0
    %v1399 = vmax.f32 %v1355, 0.0
    %v1400 = vmax.f32 %v1358, 0.0
    %v1401 = vmax.f32 %v1363, 0.0
    %v1402 = vmax.f32 %v1366, 0.0
    %v1403 = vmax.f32 %v1371, 0.0
    %v1404 = vmax.f32 %v1374, 0.0
    %v1405 = vmax.f32 %v1379, 0.0
    %v1406 = vmax.f32 %v1382, 0.0
    %v1407 = vmax.f32 %v1387, 0.0
    %v1408 = vmax.f32 %v1390, 0.0
    %v1409 = vld [vmem:[%s6] sm:$0xf]
    %v1410 = vld [vmem:[%s6 + $0x4] sm:$0xf]
    %v1411 = vpack.c.bf16 %v1394, %v1393
    %v1412 = vpack.c.bf16 %v1396, %v1395
    %v1413 = vpack.c.bf16 %v1398, %v1397
    %v1414 = vpack.c.bf16 %v1400, %v1399
    %v1415 = vpack.c.bf16 %v1402, %v1401
    %v1416 = vpack.c.bf16 %v1404, %v1403
    %v1417 = vpack.c.bf16 %v1406, %v1405
    %v1418 = vpack.c.bf16 %v1408, %v1407
    %v1421 = vunpack.c.l.b16 %v1409
    %v1422 = vunpack.c.l.b16 %v1410
    %v1423 = vpack.c.b16 %v1422, %v1421
    %1425 = vmatprep.subr.bf16.mxu0 0
    %1426 = vmatpush1.bf16.msra.mxu0 %v1411
    %1427 = vmatprep.subr.bf16.mxu0 0
    %1428 = vmatpush1.bf16.msra.mxu0 %v1412
    %1429 = vmatprep.subr.bf16.mxu0 0
    %1430 = vmatpush1.bf16.msra.mxu0 %v1413
    %1431 = vmatprep.subr.bf16.mxu0 0
    %1432 = vmatpush1.bf16.msra.mxu0 %v1414
    %1433 = vmatprep.subr.bf16.mxu0 0
    %1434 = vmatpush1.bf16.msra.mxu0 %v1415
    %1435 = vmatprep.subr.bf16.mxu0 0
    %1436 = vmatpush1.bf16.msra.mxu0 %v1416
    %1437 = vmatprep.subr.bf16.mxu0 0
    %1438 = vmatpush1.bf16.msra.mxu0 %v1417
    %1439 = vmatprep.subr.bf16.mxu0 0
    %1440 = vmatpush1.bf16.msra.mxu0 %v1418
    %1441 = vmatprep.subr.bf16.mxu0 0
    %1442 = vmatpush1.bf16.msra.mxu0 0
    %1443 = vmatprep.subr.bf16.mxu0 0
    %1444 = vmatpush1.bf16.msra.mxu0 0
    %1445 = vmatprep.subr.bf16.mxu0 0
    %1446 = vmatpush1.bf16.msra.mxu0 0
    %1447 = vmatprep.subr.bf16.mxu0 0
    %1448 = vmatpush1.bf16.msra.mxu0 0
    %1449 = vmatprep.subr.bf16.mxu0 0
    %1450 = vmatpush1.bf16.msra.mxu0 0
    %1451 = vmatprep.subr.bf16.mxu0 0
    %1452 = vmatpush1.bf16.msra.mxu0 0
    %1453 = vmatprep.subr.bf16.mxu0 0
    %1454 = vmatpush1.bf16.msra.mxu0 0
    %1455 = vmatprep.subr.bf16.mxu0 0
    %1456 = vmatpush1.bf16.msra.mxu0 0
    %1457 = vmatprep.mubr.bf16.mxu0 0
    %1458 = vmatmul.mubr.bf16.gmra.mrb[0].mxu0 %v1423
    %v1459 = vpop.f32.mrb[0].mxu0
    %v1460 = vadd.f32 0.0, %v1459
    %v1461 = vpop.f32.mrb[0].mxu0
    %v1462 = vpop.f32.mrb[0].mxu0
    %v1463 = vadd.f32 0.0, %v1462
    %v1464 = vpop.f32.mrb[0].mxu0
    %1465 = vdwg.mxu0
    %v1466 = vlaneseq
    %v1467 = vshrl.u32 %v1466, 7
    %v1468 = vsub.s32 4, %v1467
    %v1469 = vrot.slane %v128, %v1468
    %v1470 = vmul.f32 %v1460, %v1469
    %v1471 = vmul.f32 %v1463, %v1469
    %1472 = vadd.xlane.f32.xlu0 %v1470
    %v1473 = vpop.xlane.xlu0 %1472
    %1474 = vadd.xlane.f32.xlu0 %v1471
    %v1475 = vpop.xlane.xlu0 %1474
    %v1476 = vlaneseq
    %v1477 = vshrl.u32 %v1476, 7
    %v1478 = vsub.s32 5, %v1477
    %v1479 = vrot.slane %v128, %v1478
    %v1480 = vadd.f32 %v1473, %v1479
    %v1481 = vadd.f32 %v1475, %v1479
    %vm1482 = vcmask 7168
    %1483 = vst.msk [vmem:[%s8] sm:$0xff] %vm1482, %v1480
    %1484 = vst.msk [vmem:[%s8 + $0x8] sm:$0xff] %vm1482, %v1481
    // Predicated region
    $region58: #{tpu_custom_call.1} parent=1 // pred_check
      _
    $region59: #{tpu_custom_call.1} parent=1 // pred_check_branch
      %1486 = sbr.rel (0) target = $region61
    $region60: #{tpu_custom_call.1} parent=1 // pred_region
      _
    $region61: #{tpu_custom_call.1} parent=1 // pred_fallthru
      _
    // Predicated region
    $region62: #{tpu_custom_call.1} parent=1 // pred_check
      _
    $region63: #{tpu_custom_call.1} parent=1 // pred_check_branch
      %1488 = sbr.rel (0) target = $region65
    $region64: #{tpu_custom_call.1} parent=1 // pred_region
      _
    $region65: #{tpu_custom_call.1} parent=1 // pred_fallthru
      _
    %1489 = vsyncpa [#allocation3], 1
    %1490 = vsyncpa [#allocation5], 1
    %1491 = vsyncpa [#allocation8], 1
    %1492 = vsyncpa [#allocation11], 1

</llo_original>
